<compile_context>
chip_gen: v7x
topology: tpu7x:2x2x1
jax: 0.10.0
libtpu: 0.0.40
codegen_flags: <defaults>
</compile_context>

<pallas_src>
import jax
import jax.numpy as jnp
from jax import lax
from jax.experimental import pallas as pl
from jax.experimental.pallas import tpu as pltpu

_LANE_BLOCK = 128
_BLOCK_BUDGET = 24 << 20      # double-buffered block bytes we allow per grid step


def _choose_tiles(D, H, W, G, itemsize, lane=_LANE_BLOCK, budget=_BLOCK_BUDGET):
    """Pick (TD, TH) divisors of (D, H) so that (d-tiles * h-tiles * groups)
    fills the 128-lane axis, minimising VALU work then halo'd HBM traffic,
    subject to the double-buffered block footprint fitting the VMEM budget."""
    best_key, best = None, (D, H)
    for td in [t for t in range(1, D + 1) if D % t == 0]:
        for th in [t for t in range(1, H + 1) if H % t == 0]:
            nd, nh = D // td, H // th
            nblk = -(-(nd * nh * G) // lane)            # lane blocks (grid size)
            xb = (td + 2) * (th + 2) * (W + 2) * lane * itemsize
            ob = 3 * td * th * W * lane * itemsize
            wb = 3 * 27 * lane * itemsize
            fits = 2 * (xb + ob + wb) <= budget
            key = (not fits,                             # must fit VMEM
                   nblk * td * th,                       # VALU-work proxy
                   nblk * (td + 2) * (th + 2))           # HBM/halo-traffic proxy
            if best_key is None or key < best_key:
                best_key, best = key, (td, th)
    return best


def _conv3d_group_kernel(x_ref, w_ref, o_ref):
    # x_ref: (TD+2, TH+2, W+2, LB)  halo-padded tiles, one lane per (tile, group)
    # w_ref: (3, 27, LB)            3 filters x 27 taps, one lane per (tile, group)
    # o_ref: (3, TD, TH, W, LB)     all 3 filters written per grid step
    _, TD, TH, W, LB = o_ref.shape

    # Hoist the 3*27 per-tap lane coefficients out of the depth loop.
    w = w_ref[...]                                           # (3, 27, LB)
    coefs = [[w[o:o + 1, t:t + 1, :] for t in range(27)]     # each (1, 1, LB)
             for o in range(3)]

    def depth_step(d):
        accs = [jnp.zeros((TH, W, LB), jnp.float32) for _ in range(3)]
        for kd in range(3):
            plane = x_ref[d + kd]                            # (TH+2, W+2, LB), 1 load
            for kh in range(3):
                for kw in range(3):
                    tap = kd * 9 + kh * 3 + kw
                    sl = plane[kh:kh + TH, kw:kw + W, :]     # value-level shift
                    for o in range(3):                       # 3 indep FMA chains
                        accs[o] = accs[o] + sl * coefs[o][tap]
        for o in range(3):
            o_ref[o, pl.ds(d, 1)] = accs[o][None].astype(o_ref.dtype)

    if TD <= 8:
        # Short fixed trip count: full unroll for LLO scheduler visibility.
        for d in range(TD):
            depth_step(d)
    else:
        # Large depth (no lane folding): bound code size / live ranges.
        pl.loop(0, TD)(depth_step)


def voxel_perception_net(x, weight):
    """x: (N, C, D, H, W); weight: (3*C, 1, 3, 3, 3).

    Returns (N, 3*C, D, H, W), matching
    F.conv3d(x, weight, stride=1, padding=1, groups=C).
    """
    N, C, D, H, W = x.shape
    assert weight.shape == (3 * C, 1, 3, 3, 3)

    G = N * C
    LB = _LANE_BLOCK
    TD, TH = _choose_tiles(D, H, W, G, x.dtype.itemsize)
    nd, nh = D // TD, H // TH
    L = nd * nh * G                       # logical lanes = (d-tile, h-tile, n, c)
    NB = -(-L // LB)                      # lane blocks (grid size)
    GP = NB * LB

    # ---- layout plumbing (pure relayout, fused by XLA under jit) ----------
    # groups-last + spatial halo: (N,C,D,H,W) -> (D+2, H+2, W+2, G)
    xg = jnp.transpose(x, (2, 3, 4, 0, 1)).reshape(D, H, W, G)
    xg = jnp.pad(xg, ((1, 1), (1, 1), (1, 1), (0, 0)))

    # Fold overlapping (TD+2, TH+2) windows onto the lane axis:
    #   lane = ((di * nh + hi) * N + n) * C + c
    rows = []
    for di in range(nd):
        cols = []
        for hi in range(nh):
            cols.append(xg[di * TD:di * TD + TD + 2,
                           hi * TH:hi * TH + TH + 2])        # (TD+2,TH+2,W+2,G)
        rows.append(jnp.stack(cols, axis=3))                 # (TD+2,TH+2,W+2,nh,G)
    xt = jnp.stack(rows, axis=3)                             # (TD+2,TH+2,W+2,nd,nh,G)
    xt = xt.reshape(TD + 2, TH + 2, W + 2, L)
    xt = jnp.pad(xt, ((0, 0), (0, 0), (0, 0), (0, GP - L)))

    # weights: (3C,1,3,3,3) -> (C,3,27) -> (3,27,C) -> tile over tiles*N -> pad
    wc = jnp.transpose(weight.reshape(C, 3, 27), (1, 2, 0))  # (3, 27, C)
    wg = jnp.tile(wc, (1, 1, nd * nh * N))                   # (3, 27, L)
    wg = jnp.pad(wg, ((0, 0), (0, 0), (0, GP - L)))          # (3, 27, GP)

    # ---- kernel ------------------------------------------------------------
    xb = (TD + 2) * (TH + 2) * (W + 2) * LB * x.dtype.itemsize
    ob = 3 * TD * TH * W * LB * x.dtype.itemsize
    wb = 3 * 27 * LB * weight.dtype.itemsize
    vmem_limit = int(min(max(2 * (xb + ob + wb) + (8 << 20), 32 << 20), 48 << 20))

    flops = 2 * 27 * (N * 3 * C) * D * H * W
    bytes_accessed = (x.size + (N * 3 * C) * D * H * W) * x.dtype.itemsize \
        + weight.size * weight.dtype.itemsize

    out = pl.pallas_call(
        _conv3d_group_kernel,
        out_shape=jax.ShapeDtypeStruct((3, TD, TH, W, GP), x.dtype),
        grid_spec=pltpu.PrefetchScalarGridSpec(
            num_scalar_prefetch=0,
            grid=(NB,),                                # lane blocks only
            in_specs=[
                pl.BlockSpec((TD + 2, TH + 2, W + 2, LB), lambda g: (0, 0, 0, g)),
                pl.BlockSpec((3, 27, LB), lambda g: (0, 0, g)),
            ],
            out_specs=pl.BlockSpec((3, TD, TH, W, LB), lambda g: (0, 0, 0, 0, g)),
        ),
        compiler_params=pltpu.CompilerParams(
            dimension_semantics=("parallel",),
            vmem_limit_bytes=vmem_limit,
        ),
        cost_estimate=pl.CostEstimate(
            flops=flops, transcendentals=0, bytes_accessed=bytes_accessed),
    )(xt, wg)

    # ---- back to PyTorch layout --------------------------------------------
    out = out[..., :L].reshape(3, TD, TH, W, nd, nh, N, C)
    out = jnp.transpose(out, (6, 7, 0, 4, 1, 5, 2, 3))   # (N, C, 3, nd, TD, nh, TH, W)
    return out.reshape(N, 3 * C, D, H, W)                # channel c*3+f matches PyTorch


def _reference_conv3d(x, weight, groups):
    # Pure-JAX reference (XLA conv) for correctness checking.
    return lax.conv_general_dilated(
        x, weight,
        window_strides=(1, 1, 1),
        padding=((1, 1), (1, 1), (1, 1)),
        dimension_numbers=("NCDHW", "OIDHW", "NCDHW"),
        feature_group_count=groups,
    )


if __name__ == "__main__":
    key = jax.random.PRNGKey(0)
    kx, kw = jax.random.split(key)

    # Small shapes consistent with the module: num_channels=2 -> out channels 6.
    N, C, D, H, W = 2, 2, 8, 8, 8
    normal_std = 0.02

    x = jax.random.normal(kx, (N, C, D, H, W), dtype=jnp.float32)
    # Conv3d weight init: normal(std=0.02), bias=False in the module.
    weight = normal_std * jax.random.normal(kw, (3 * C, 1, 3, 3, 3), dtype=jnp.float32)

    vpn = jax.jit(voxel_perception_net)
    out = jax.block_until_ready(vpn(x, weight))

    ref = _reference_conv3d(x, weight, groups=C)
    assert out.shape == (N, 3 * C, D, H, W)
    assert jnp.allclose(out, ref, atol=1e-5, rtol=1e-5)

    print("KERNEL_OK")
</pallas_src>

<mosaic_0001>
module attributes {stable_mosaic.version = 11 : i64} {
  func.func @_conv3d_group_kernel(%arg0: i32, %arg1: memref<3x4x10x128xf32, #tpu.memory_space<vmem>>, %arg2: memref<3x27x128xf32, #tpu.memory_space<vmem>>, %arg3: memref<3x1x2x8x128xf32, #tpu.memory_space<vmem>>) attributes {dimension_semantics = [#tpu.dimension_semantics<parallel>], iteration_bounds = array<i64: 1>, scalar_prefetch = 0 : i64, scratch_operands = 0 : i64, tpu.core_type = #tpu.core_type<tc>, window_params = [{transform_indices = @transform_0, window_bounds = array<i64: 3, 4, 10, 128>}, {transform_indices = @transform_1, window_bounds = array<i64: 3, 27, 128>}, {transform_indices = @transform_2, window_bounds = array<i64: 3, 1, 2, 8, 128>}]} {
    %c0 = arith.constant 0 : index
    %c0_0 = arith.constant 0 : index
    %c0_1 = arith.constant 0 : index
    %0 = vector.load %arg2[%c0, %c0_0, %c0_1] : memref<3x27x128xf32, #tpu.memory_space<vmem>>, vector<3x27x128xf32>
    %1 = vector.extract_strided_slice %0 {offsets = [0, 0, 0], sizes = [1, 1, 128], strides = [1, 1, 1]} : vector<3x27x128xf32> to vector<1x1x128xf32>
    %2 = vector.extract_strided_slice %0 {offsets = [0, 1, 0], sizes = [1, 1, 128], strides = [1, 1, 1]} : vector<3x27x128xf32> to vector<1x1x128xf32>
    %3 = vector.extract_strided_slice %0 {offsets = [0, 2, 0], sizes = [1, 1, 128], strides = [1, 1, 1]} : vector<3x27x128xf32> to vector<1x1x128xf32>
    %4 = vector.extract_strided_slice %0 {offsets = [0, 3, 0], sizes = [1, 1, 128], strides = [1, 1, 1]} : vector<3x27x128xf32> to vector<1x1x128xf32>
    %5 = vector.extract_strided_slice %0 {offsets = [0, 4, 0], sizes = [1, 1, 128], strides = [1, 1, 1]} : vector<3x27x128xf32> to vector<1x1x128xf32>
    %6 = vector.extract_strided_slice %0 {offsets = [0, 5, 0], sizes = [1, 1, 128], strides = [1, 1, 1]} : vector<3x27x128xf32> to vector<1x1x128xf32>
    %7 = vector.extract_strided_slice %0 {offsets = [0, 6, 0], sizes = [1, 1, 128], strides = [1, 1, 1]} : vector<3x27x128xf32> to vector<1x1x128xf32>
    %8 = vector.extract_strided_slice %0 {offsets = [0, 7, 0], sizes = [1, 1, 128], strides = [1, 1, 1]} : vector<3x27x128xf32> to vector<1x1x128xf32>
    %9 = vector.extract_strided_slice %0 {offsets = [0, 8, 0], sizes = [1, 1, 128], strides = [1, 1, 1]} : vector<3x27x128xf32> to vector<1x1x128xf32>
    %10 = vector.extract_strided_slice %0 {offsets = [0, 9, 0], sizes = [1, 1, 128], strides = [1, 1, 1]} : vector<3x27x128xf32> to vector<1x1x128xf32>
    %11 = vector.extract_strided_slice %0 {offsets = [0, 10, 0], sizes = [1, 1, 128], strides = [1, 1, 1]} : vector<3x27x128xf32> to vector<1x1x128xf32>
    %12 = vector.extract_strided_slice %0 {offsets = [0, 11, 0], sizes = [1, 1, 128], strides = [1, 1, 1]} : vector<3x27x128xf32> to vector<1x1x128xf32>
    %13 = vector.extract_strided_slice %0 {offsets = [0, 12, 0], sizes = [1, 1, 128], strides = [1, 1, 1]} : vector<3x27x128xf32> to vector<1x1x128xf32>
    %14 = vector.extract_strided_slice %0 {offsets = [0, 13, 0], sizes = [1, 1, 128], strides = [1, 1, 1]} : vector<3x27x128xf32> to vector<1x1x128xf32>
    %15 = vector.extract_strided_slice %0 {offsets = [0, 14, 0], sizes = [1, 1, 128], strides = [1, 1, 1]} : vector<3x27x128xf32> to vector<1x1x128xf32>
    %16 = vector.extract_strided_slice %0 {offsets = [0, 15, 0], sizes = [1, 1, 128], strides = [1, 1, 1]} : vector<3x27x128xf32> to vector<1x1x128xf32>
    %17 = vector.extract_strided_slice %0 {offsets = [0, 16, 0], sizes = [1, 1, 128], strides = [1, 1, 1]} : vector<3x27x128xf32> to vector<1x1x128xf32>
    %18 = vector.extract_strided_slice %0 {offsets = [0, 17, 0], sizes = [1, 1, 128], strides = [1, 1, 1]} : vector<3x27x128xf32> to vector<1x1x128xf32>
    %19 = vector.extract_strided_slice %0 {offsets = [0, 18, 0], sizes = [1, 1, 128], strides = [1, 1, 1]} : vector<3x27x128xf32> to vector<1x1x128xf32>
    %20 = vector.extract_strided_slice %0 {offsets = [0, 19, 0], sizes = [1, 1, 128], strides = [1, 1, 1]} : vector<3x27x128xf32> to vector<1x1x128xf32>
    %21 = vector.extract_strided_slice %0 {offsets = [0, 20, 0], sizes = [1, 1, 128], strides = [1, 1, 1]} : vector<3x27x128xf32> to vector<1x1x128xf32>
    %22 = vector.extract_strided_slice %0 {offsets = [0, 21, 0], sizes = [1, 1, 128], strides = [1, 1, 1]} : vector<3x27x128xf32> to vector<1x1x128xf32>
    %23 = vector.extract_strided_slice %0 {offsets = [0, 22, 0], sizes = [1, 1, 128], strides = [1, 1, 1]} : vector<3x27x128xf32> to vector<1x1x128xf32>
    %24 = vector.extract_strided_slice %0 {offsets = [0, 23, 0], sizes = [1, 1, 128], strides = [1, 1, 1]} : vector<3x27x128xf32> to vector<1x1x128xf32>
    %25 = vector.extract_strided_slice %0 {offsets = [0, 24, 0], sizes = [1, 1, 128], strides = [1, 1, 1]} : vector<3x27x128xf32> to vector<1x1x128xf32>
    %26 = vector.extract_strided_slice %0 {offsets = [0, 25, 0], sizes = [1, 1, 128], strides = [1, 1, 1]} : vector<3x27x128xf32> to vector<1x1x128xf32>
    %27 = vector.extract_strided_slice %0 {offsets = [0, 26, 0], sizes = [1, 1, 128], strides = [1, 1, 1]} : vector<3x27x128xf32> to vector<1x1x128xf32>
    %28 = vector.extract_strided_slice %0 {offsets = [1, 0, 0], sizes = [1, 1, 128], strides = [1, 1, 1]} : vector<3x27x128xf32> to vector<1x1x128xf32>
    %29 = vector.extract_strided_slice %0 {offsets = [1, 1, 0], sizes = [1, 1, 128], strides = [1, 1, 1]} : vector<3x27x128xf32> to vector<1x1x128xf32>
    %30 = vector.extract_strided_slice %0 {offsets = [1, 2, 0], sizes = [1, 1, 128], strides = [1, 1, 1]} : vector<3x27x128xf32> to vector<1x1x128xf32>
    %31 = vector.extract_strided_slice %0 {offsets = [1, 3, 0], sizes = [1, 1, 128], strides = [1, 1, 1]} : vector<3x27x128xf32> to vector<1x1x128xf32>
    %32 = vector.extract_strided_slice %0 {offsets = [1, 4, 0], sizes = [1, 1, 128], strides = [1, 1, 1]} : vector<3x27x128xf32> to vector<1x1x128xf32>
    %33 = vector.extract_strided_slice %0 {offsets = [1, 5, 0], sizes = [1, 1, 128], strides = [1, 1, 1]} : vector<3x27x128xf32> to vector<1x1x128xf32>
    %34 = vector.extract_strided_slice %0 {offsets = [1, 6, 0], sizes = [1, 1, 128], strides = [1, 1, 1]} : vector<3x27x128xf32> to vector<1x1x128xf32>
    %35 = vector.extract_strided_slice %0 {offsets = [1, 7, 0], sizes = [1, 1, 128], strides = [1, 1, 1]} : vector<3x27x128xf32> to vector<1x1x128xf32>
    %36 = vector.extract_strided_slice %0 {offsets = [1, 8, 0], sizes = [1, 1, 128], strides = [1, 1, 1]} : vector<3x27x128xf32> to vector<1x1x128xf32>
    %37 = vector.extract_strided_slice %0 {offsets = [1, 9, 0], sizes = [1, 1, 128], strides = [1, 1, 1]} : vector<3x27x128xf32> to vector<1x1x128xf32>
    %38 = vector.extract_strided_slice %0 {offsets = [1, 10, 0], sizes = [1, 1, 128], strides = [1, 1, 1]} : vector<3x27x128xf32> to vector<1x1x128xf32>
    %39 = vector.extract_strided_slice %0 {offsets = [1, 11, 0], sizes = [1, 1, 128], strides = [1, 1, 1]} : vector<3x27x128xf32> to vector<1x1x128xf32>
    %40 = vector.extract_strided_slice %0 {offsets = [1, 12, 0], sizes = [1, 1, 128], strides = [1, 1, 1]} : vector<3x27x128xf32> to vector<1x1x128xf32>
    %41 = vector.extract_strided_slice %0 {offsets = [1, 13, 0], sizes = [1, 1, 128], strides = [1, 1, 1]} : vector<3x27x128xf32> to vector<1x1x128xf32>
    %42 = vector.extract_strided_slice %0 {offsets = [1, 14, 0], sizes = [1, 1, 128], strides = [1, 1, 1]} : vector<3x27x128xf32> to vector<1x1x128xf32>
    %43 = vector.extract_strided_slice %0 {offsets = [1, 15, 0], sizes = [1, 1, 128], strides = [1, 1, 1]} : vector<3x27x128xf32> to vector<1x1x128xf32>
    %44 = vector.extract_strided_slice %0 {offsets = [1, 16, 0], sizes = [1, 1, 128], strides = [1, 1, 1]} : vector<3x27x128xf32> to vector<1x1x128xf32>
    %45 = vector.extract_strided_slice %0 {offsets = [1, 17, 0], sizes = [1, 1, 128], strides = [1, 1, 1]} : vector<3x27x128xf32> to vector<1x1x128xf32>
    %46 = vector.extract_strided_slice %0 {offsets = [1, 18, 0], sizes = [1, 1, 128], strides = [1, 1, 1]} : vector<3x27x128xf32> to vector<1x1x128xf32>
    %47 = vector.extract_strided_slice %0 {offsets = [1, 19, 0], sizes = [1, 1, 128], strides = [1, 1, 1]} : vector<3x27x128xf32> to vector<1x1x128xf32>
    %48 = vector.extract_strided_slice %0 {offsets = [1, 20, 0], sizes = [1, 1, 128], strides = [1, 1, 1]} : vector<3x27x128xf32> to vector<1x1x128xf32>
    %49 = vector.extract_strided_slice %0 {offsets = [1, 21, 0], sizes = [1, 1, 128], strides = [1, 1, 1]} : vector<3x27x128xf32> to vector<1x1x128xf32>
    %50 = vector.extract_strided_slice %0 {offsets = [1, 22, 0], sizes = [1, 1, 128], strides = [1, 1, 1]} : vector<3x27x128xf32> to vector<1x1x128xf32>
    %51 = vector.extract_strided_slice %0 {offsets = [1, 23, 0], sizes = [1, 1, 128], strides = [1, 1, 1]} : vector<3x27x128xf32> to vector<1x1x128xf32>
    %52 = vector.extract_strided_slice %0 {offsets = [1, 24, 0], sizes = [1, 1, 128], strides = [1, 1, 1]} : vector<3x27x128xf32> to vector<1x1x128xf32>
    %53 = vector.extract_strided_slice %0 {offsets = [1, 25, 0], sizes = [1, 1, 128], strides = [1, 1, 1]} : vector<3x27x128xf32> to vector<1x1x128xf32>
    %54 = vector.extract_strided_slice %0 {offsets = [1, 26, 0], sizes = [1, 1, 128], strides = [1, 1, 1]} : vector<3x27x128xf32> to vector<1x1x128xf32>
    %55 = vector.extract_strided_slice %0 {offsets = [2, 0, 0], sizes = [1, 1, 128], strides = [1, 1, 1]} : vector<3x27x128xf32> to vector<1x1x128xf32>
    %56 = vector.extract_strided_slice %0 {offsets = [2, 1, 0], sizes = [1, 1, 128], strides = [1, 1, 1]} : vector<3x27x128xf32> to vector<1x1x128xf32>
    %57 = vector.extract_strided_slice %0 {offsets = [2, 2, 0], sizes = [1, 1, 128], strides = [1, 1, 1]} : vector<3x27x128xf32> to vector<1x1x128xf32>
    %58 = vector.extract_strided_slice %0 {offsets = [2, 3, 0], sizes = [1, 1, 128], strides = [1, 1, 1]} : vector<3x27x128xf32> to vector<1x1x128xf32>
    %59 = vector.extract_strided_slice %0 {offsets = [2, 4, 0], sizes = [1, 1, 128], strides = [1, 1, 1]} : vector<3x27x128xf32> to vector<1x1x128xf32>
    %60 = vector.extract_strided_slice %0 {offsets = [2, 5, 0], sizes = [1, 1, 128], strides = [1, 1, 1]} : vector<3x27x128xf32> to vector<1x1x128xf32>
    %61 = vector.extract_strided_slice %0 {offsets = [2, 6, 0], sizes = [1, 1, 128], strides = [1, 1, 1]} : vector<3x27x128xf32> to vector<1x1x128xf32>
    %62 = vector.extract_strided_slice %0 {offsets = [2, 7, 0], sizes = [1, 1, 128], strides = [1, 1, 1]} : vector<3x27x128xf32> to vector<1x1x128xf32>
    %63 = vector.extract_strided_slice %0 {offsets = [2, 8, 0], sizes = [1, 1, 128], strides = [1, 1, 1]} : vector<3x27x128xf32> to vector<1x1x128xf32>
    %64 = vector.extract_strided_slice %0 {offsets = [2, 9, 0], sizes = [1, 1, 128], strides = [1, 1, 1]} : vector<3x27x128xf32> to vector<1x1x128xf32>
    %65 = vector.extract_strided_slice %0 {offsets = [2, 10, 0], sizes = [1, 1, 128], strides = [1, 1, 1]} : vector<3x27x128xf32> to vector<1x1x128xf32>
    %66 = vector.extract_strided_slice %0 {offsets = [2, 11, 0], sizes = [1, 1, 128], strides = [1, 1, 1]} : vector<3x27x128xf32> to vector<1x1x128xf32>
    %67 = vector.extract_strided_slice %0 {offsets = [2, 12, 0], sizes = [1, 1, 128], strides = [1, 1, 1]} : vector<3x27x128xf32> to vector<1x1x128xf32>
    %68 = vector.extract_strided_slice %0 {offsets = [2, 13, 0], sizes = [1, 1, 128], strides = [1, 1, 1]} : vector<3x27x128xf32> to vector<1x1x128xf32>
    %69 = vector.extract_strided_slice %0 {offsets = [2, 14, 0], sizes = [1, 1, 128], strides = [1, 1, 1]} : vector<3x27x128xf32> to vector<1x1x128xf32>
    %70 = vector.extract_strided_slice %0 {offsets = [2, 15, 0], sizes = [1, 1, 128], strides = [1, 1, 1]} : vector<3x27x128xf32> to vector<1x1x128xf32>
    %71 = vector.extract_strided_slice %0 {offsets = [2, 16, 0], sizes = [1, 1, 128], strides = [1, 1, 1]} : vector<3x27x128xf32> to vector<1x1x128xf32>
    %72 = vector.extract_strided_slice %0 {offsets = [2, 17, 0], sizes = [1, 1, 128], strides = [1, 1, 1]} : vector<3x27x128xf32> to vector<1x1x128xf32>
    %73 = vector.extract_strided_slice %0 {offsets = [2, 18, 0], sizes = [1, 1, 128], strides = [1, 1, 1]} : vector<3x27x128xf32> to vector<1x1x128xf32>
    %74 = vector.extract_strided_slice %0 {offsets = [2, 19, 0], sizes = [1, 1, 128], strides = [1, 1, 1]} : vector<3x27x128xf32> to vector<1x1x128xf32>
    %75 = vector.extract_strided_slice %0 {offsets = [2, 20, 0], sizes = [1, 1, 128], strides = [1, 1, 1]} : vector<3x27x128xf32> to vector<1x1x128xf32>
    %76 = vector.extract_strided_slice %0 {offsets = [2, 21, 0], sizes = [1, 1, 128], strides = [1, 1, 1]} : vector<3x27x128xf32> to vector<1x1x128xf32>
    %77 = vector.extract_strided_slice %0 {offsets = [2, 22, 0], sizes = [1, 1, 128], strides = [1, 1, 1]} : vector<3x27x128xf32> to vector<1x1x128xf32>
    %78 = vector.extract_strided_slice %0 {offsets = [2, 23, 0], sizes = [1, 1, 128], strides = [1, 1, 1]} : vector<3x27x128xf32> to vector<1x1x128xf32>
    %79 = vector.extract_strided_slice %0 {offsets = [2, 24, 0], sizes = [1, 1, 128], strides = [1, 1, 1]} : vector<3x27x128xf32> to vector<1x1x128xf32>
    %80 = vector.extract_strided_slice %0 {offsets = [2, 25, 0], sizes = [1, 1, 128], strides = [1, 1, 1]} : vector<3x27x128xf32> to vector<1x1x128xf32>
    %81 = vector.extract_strided_slice %0 {offsets = [2, 26, 0], sizes = [1, 1, 128], strides = [1, 1, 1]} : vector<3x27x128xf32> to vector<1x1x128xf32>
    %cst = arith.constant 0.000000e+00 : f32
    %82 = vector.broadcast %cst : f32 to vector<2x8x128xf32>
    %cst_2 = arith.constant 0.000000e+00 : f32
    %83 = vector.broadcast %cst_2 : f32 to vector<2x8x128xf32>
    %cst_3 = arith.constant 0.000000e+00 : f32
    %84 = vector.broadcast %cst_3 : f32 to vector<2x8x128xf32>
    %c0_4 = arith.constant 0 : index
    %c0_5 = arith.constant 0 : index
    %c0_6 = arith.constant 0 : index
    %c0_7 = arith.constant 0 : index
    %85 = vector.load %arg1[%c0_4, %c0_5, %c0_6, %c0_7] : memref<3x4x10x128xf32, #tpu.memory_space<vmem>>, vector<1x4x10x128xf32>
    %86 = vector.shape_cast %85 : vector<1x4x10x128xf32> to vector<4x10x128xf32>
    %87 = vector.extract_strided_slice %86 {offsets = [0, 0, 0], sizes = [2, 8, 128], strides = [1, 1, 1]} : vector<4x10x128xf32> to vector<2x8x128xf32>
    %88 = vector.broadcast %1 : vector<1x1x128xf32> to vector<2x8x128xf32>
    %89 = arith.mulf %87, %88 : vector<2x8x128xf32>
    %90 = arith.addf %82, %89 : vector<2x8x128xf32>
    %91 = vector.broadcast %28 : vector<1x1x128xf32> to vector<2x8x128xf32>
    %92 = arith.mulf %87, %91 : vector<2x8x128xf32>
    %93 = arith.addf %83, %92 : vector<2x8x128xf32>
    %94 = vector.broadcast %55 : vector<1x1x128xf32> to vector<2x8x128xf32>
    %95 = arith.mulf %87, %94 : vector<2x8x128xf32>
    %96 = arith.addf %84, %95 : vector<2x8x128xf32>
    %97 = vector.extract_strided_slice %86 {offsets = [0, 1, 0], sizes = [2, 8, 128], strides = [1, 1, 1]} : vector<4x10x128xf32> to vector<2x8x128xf32>
    %98 = vector.broadcast %2 : vector<1x1x128xf32> to vector<2x8x128xf32>
    %99 = arith.mulf %97, %98 : vector<2x8x128xf32>
    %100 = arith.addf %90, %99 : vector<2x8x128xf32>
    %101 = vector.broadcast %29 : vector<1x1x128xf32> to vector<2x8x128xf32>
    %102 = arith.mulf %97, %101 : vector<2x8x128xf32>
    %103 = arith.addf %93, %102 : vector<2x8x128xf32>
    %104 = vector.broadcast %56 : vector<1x1x128xf32> to vector<2x8x128xf32>
    %105 = arith.mulf %97, %104 : vector<2x8x128xf32>
    %106 = arith.addf %96, %105 : vector<2x8x128xf32>
    %107 = vector.extract_strided_slice %86 {offsets = [0, 2, 0], sizes = [2, 8, 128], strides = [1, 1, 1]} : vector<4x10x128xf32> to vector<2x8x128xf32>
    %108 = vector.broadcast %3 : vector<1x1x128xf32> to vector<2x8x128xf32>
    %109 = arith.mulf %107, %108 : vector<2x8x128xf32>
    %110 = arith.addf %100, %109 : vector<2x8x128xf32>
    %111 = vector.broadcast %30 : vector<1x1x128xf32> to vector<2x8x128xf32>
    %112 = arith.mulf %107, %111 : vector<2x8x128xf32>
    %113 = arith.addf %103, %112 : vector<2x8x128xf32>
    %114 = vector.broadcast %57 : vector<1x1x128xf32> to vector<2x8x128xf32>
    %115 = arith.mulf %107, %114 : vector<2x8x128xf32>
    %116 = arith.addf %106, %115 : vector<2x8x128xf32>
    %117 = vector.extract_strided_slice %86 {offsets = [1, 0, 0], sizes = [2, 8, 128], strides = [1, 1, 1]} : vector<4x10x128xf32> to vector<2x8x128xf32>
    %118 = vector.broadcast %4 : vector<1x1x128xf32> to vector<2x8x128xf32>
    %119 = arith.mulf %117, %118 : vector<2x8x128xf32>
    %120 = arith.addf %110, %119 : vector<2x8x128xf32>
    %121 = vector.broadcast %31 : vector<1x1x128xf32> to vector<2x8x128xf32>
    %122 = arith.mulf %117, %121 : vector<2x8x128xf32>
    %123 = arith.addf %113, %122 : vector<2x8x128xf32>
    %124 = vector.broadcast %58 : vector<1x1x128xf32> to vector<2x8x128xf32>
    %125 = arith.mulf %117, %124 : vector<2x8x128xf32>
    %126 = arith.addf %116, %125 : vector<2x8x128xf32>
    %127 = vector.extract_strided_slice %86 {offsets = [1, 1, 0], sizes = [2, 8, 128], strides = [1, 1, 1]} : vector<4x10x128xf32> to vector<2x8x128xf32>
    %128 = vector.broadcast %5 : vector<1x1x128xf32> to vector<2x8x128xf32>
    %129 = arith.mulf %127, %128 : vector<2x8x128xf32>
    %130 = arith.addf %120, %129 : vector<2x8x128xf32>
    %131 = vector.broadcast %32 : vector<1x1x128xf32> to vector<2x8x128xf32>
    %132 = arith.mulf %127, %131 : vector<2x8x128xf32>
    %133 = arith.addf %123, %132 : vector<2x8x128xf32>
    %134 = vector.broadcast %59 : vector<1x1x128xf32> to vector<2x8x128xf32>
    %135 = arith.mulf %127, %134 : vector<2x8x128xf32>
    %136 = arith.addf %126, %135 : vector<2x8x128xf32>
    %137 = vector.extract_strided_slice %86 {offsets = [1, 2, 0], sizes = [2, 8, 128], strides = [1, 1, 1]} : vector<4x10x128xf32> to vector<2x8x128xf32>
    %138 = vector.broadcast %6 : vector<1x1x128xf32> to vector<2x8x128xf32>
    %139 = arith.mulf %137, %138 : vector<2x8x128xf32>
    %140 = arith.addf %130, %139 : vector<2x8x128xf32>
    %141 = vector.broadcast %33 : vector<1x1x128xf32> to vector<2x8x128xf32>
    %142 = arith.mulf %137, %141 : vector<2x8x128xf32>
    %143 = arith.addf %133, %142 : vector<2x8x128xf32>
    %144 = vector.broadcast %60 : vector<1x1x128xf32> to vector<2x8x128xf32>
    %145 = arith.mulf %137, %144 : vector<2x8x128xf32>
    %146 = arith.addf %136, %145 : vector<2x8x128xf32>
    %147 = vector.extract_strided_slice %86 {offsets = [2, 0, 0], sizes = [2, 8, 128], strides = [1, 1, 1]} : vector<4x10x128xf32> to vector<2x8x128xf32>
    %148 = vector.broadcast %7 : vector<1x1x128xf32> to vector<2x8x128xf32>
    %149 = arith.mulf %147, %148 : vector<2x8x128xf32>
    %150 = arith.addf %140, %149 : vector<2x8x128xf32>
    %151 = vector.broadcast %34 : vector<1x1x128xf32> to vector<2x8x128xf32>
    %152 = arith.mulf %147, %151 : vector<2x8x128xf32>
    %153 = arith.addf %143, %152 : vector<2x8x128xf32>
    %154 = vector.broadcast %61 : vector<1x1x128xf32> to vector<2x8x128xf32>
    %155 = arith.mulf %147, %154 : vector<2x8x128xf32>
    %156 = arith.addf %146, %155 : vector<2x8x128xf32>
    %157 = vector.extract_strided_slice %86 {offsets = [2, 1, 0], sizes = [2, 8, 128], strides = [1, 1, 1]} : vector<4x10x128xf32> to vector<2x8x128xf32>
    %158 = vector.broadcast %8 : vector<1x1x128xf32> to vector<2x8x128xf32>
    %159 = arith.mulf %157, %158 : vector<2x8x128xf32>
    %160 = arith.addf %150, %159 : vector<2x8x128xf32>
    %161 = vector.broadcast %35 : vector<1x1x128xf32> to vector<2x8x128xf32>
    %162 = arith.mulf %157, %161 : vector<2x8x128xf32>
    %163 = arith.addf %153, %162 : vector<2x8x128xf32>
    %164 = vector.broadcast %62 : vector<1x1x128xf32> to vector<2x8x128xf32>
    %165 = arith.mulf %157, %164 : vector<2x8x128xf32>
    %166 = arith.addf %156, %165 : vector<2x8x128xf32>
    %167 = vector.extract_strided_slice %86 {offsets = [2, 2, 0], sizes = [2, 8, 128], strides = [1, 1, 1]} : vector<4x10x128xf32> to vector<2x8x128xf32>
    %168 = vector.broadcast %9 : vector<1x1x128xf32> to vector<2x8x128xf32>
    %169 = arith.mulf %167, %168 : vector<2x8x128xf32>
    %170 = arith.addf %160, %169 : vector<2x8x128xf32>
    %171 = vector.broadcast %36 : vector<1x1x128xf32> to vector<2x8x128xf32>
    %172 = arith.mulf %167, %171 : vector<2x8x128xf32>
    %173 = arith.addf %163, %172 : vector<2x8x128xf32>
    %174 = vector.broadcast %63 : vector<1x1x128xf32> to vector<2x8x128xf32>
    %175 = arith.mulf %167, %174 : vector<2x8x128xf32>
    %176 = arith.addf %166, %175 : vector<2x8x128xf32>
    %c1 = arith.constant 1 : index
    %c0_8 = arith.constant 0 : index
    %c0_9 = arith.constant 0 : index
    %c0_10 = arith.constant 0 : index
    %177 = vector.load %arg1[%c1, %c0_8, %c0_9, %c0_10] : memref<3x4x10x128xf32, #tpu.memory_space<vmem>>, vector<1x4x10x128xf32>
    %178 = vector.shape_cast %177 : vector<1x4x10x128xf32> to vector<4x10x128xf32>
    %179 = vector.extract_strided_slice %178 {offsets = [0, 0, 0], sizes = [2, 8, 128], strides = [1, 1, 1]} : vector<4x10x128xf32> to vector<2x8x128xf32>
    %180 = vector.broadcast %10 : vector<1x1x128xf32> to vector<2x8x128xf32>
    %181 = arith.mulf %179, %180 : vector<2x8x128xf32>
    %182 = arith.addf %170, %181 : vector<2x8x128xf32>
    %183 = vector.broadcast %37 : vector<1x1x128xf32> to vector<2x8x128xf32>
    %184 = arith.mulf %179, %183 : vector<2x8x128xf32>
    %185 = arith.addf %173, %184 : vector<2x8x128xf32>
    %186 = vector.broadcast %64 : vector<1x1x128xf32> to vector<2x8x128xf32>
    %187 = arith.mulf %179, %186 : vector<2x8x128xf32>
    %188 = arith.addf %176, %187 : vector<2x8x128xf32>
    %189 = vector.extract_strided_slice %178 {offsets = [0, 1, 0], sizes = [2, 8, 128], strides = [1, 1, 1]} : vector<4x10x128xf32> to vector<2x8x128xf32>
    %190 = vector.broadcast %11 : vector<1x1x128xf32> to vector<2x8x128xf32>
    %191 = arith.mulf %189, %190 : vector<2x8x128xf32>
    %192 = arith.addf %182, %191 : vector<2x8x128xf32>
    %193 = vector.broadcast %38 : vector<1x1x128xf32> to vector<2x8x128xf32>
    %194 = arith.mulf %189, %193 : vector<2x8x128xf32>
    %195 = arith.addf %185, %194 : vector<2x8x128xf32>
    %196 = vector.broadcast %65 : vector<1x1x128xf32> to vector<2x8x128xf32>
    %197 = arith.mulf %189, %196 : vector<2x8x128xf32>
    %198 = arith.addf %188, %197 : vector<2x8x128xf32>
    %199 = vector.extract_strided_slice %178 {offsets = [0, 2, 0], sizes = [2, 8, 128], strides = [1, 1, 1]} : vector<4x10x128xf32> to vector<2x8x128xf32>
    %200 = vector.broadcast %12 : vector<1x1x128xf32> to vector<2x8x128xf32>
    %201 = arith.mulf %199, %200 : vector<2x8x128xf32>
    %202 = arith.addf %192, %201 : vector<2x8x128xf32>
    %203 = vector.broadcast %39 : vector<1x1x128xf32> to vector<2x8x128xf32>
    %204 = arith.mulf %199, %203 : vector<2x8x128xf32>
    %205 = arith.addf %195, %204 : vector<2x8x128xf32>
    %206 = vector.broadcast %66 : vector<1x1x128xf32> to vector<2x8x128xf32>
    %207 = arith.mulf %199, %206 : vector<2x8x128xf32>
    %208 = arith.addf %198, %207 : vector<2x8x128xf32>
    %209 = vector.extract_strided_slice %178 {offsets = [1, 0, 0], sizes = [2, 8, 128], strides = [1, 1, 1]} : vector<4x10x128xf32> to vector<2x8x128xf32>
    %210 = vector.broadcast %13 : vector<1x1x128xf32> to vector<2x8x128xf32>
    %211 = arith.mulf %209, %210 : vector<2x8x128xf32>
    %212 = arith.addf %202, %211 : vector<2x8x128xf32>
    %213 = vector.broadcast %40 : vector<1x1x128xf32> to vector<2x8x128xf32>
    %214 = arith.mulf %209, %213 : vector<2x8x128xf32>
    %215 = arith.addf %205, %214 : vector<2x8x128xf32>
    %216 = vector.broadcast %67 : vector<1x1x128xf32> to vector<2x8x128xf32>
    %217 = arith.mulf %209, %216 : vector<2x8x128xf32>
    %218 = arith.addf %208, %217 : vector<2x8x128xf32>
    %219 = vector.extract_strided_slice %178 {offsets = [1, 1, 0], sizes = [2, 8, 128], strides = [1, 1, 1]} : vector<4x10x128xf32> to vector<2x8x128xf32>
    %220 = vector.broadcast %14 : vector<1x1x128xf32> to vector<2x8x128xf32>
    %221 = arith.mulf %219, %220 : vector<2x8x128xf32>
    %222 = arith.addf %212, %221 : vector<2x8x128xf32>
    %223 = vector.broadcast %41 : vector<1x1x128xf32> to vector<2x8x128xf32>
    %224 = arith.mulf %219, %223 : vector<2x8x128xf32>
    %225 = arith.addf %215, %224 : vector<2x8x128xf32>
    %226 = vector.broadcast %68 : vector<1x1x128xf32> to vector<2x8x128xf32>
    %227 = arith.mulf %219, %226 : vector<2x8x128xf32>
    %228 = arith.addf %218, %227 : vector<2x8x128xf32>
    %229 = vector.extract_strided_slice %178 {offsets = [1, 2, 0], sizes = [2, 8, 128], strides = [1, 1, 1]} : vector<4x10x128xf32> to vector<2x8x128xf32>
    %230 = vector.broadcast %15 : vector<1x1x128xf32> to vector<2x8x128xf32>
    %231 = arith.mulf %229, %230 : vector<2x8x128xf32>
    %232 = arith.addf %222, %231 : vector<2x8x128xf32>
    %233 = vector.broadcast %42 : vector<1x1x128xf32> to vector<2x8x128xf32>
    %234 = arith.mulf %229, %233 : vector<2x8x128xf32>
    %235 = arith.addf %225, %234 : vector<2x8x128xf32>
    %236 = vector.broadcast %69 : vector<1x1x128xf32> to vector<2x8x128xf32>
    %237 = arith.mulf %229, %236 : vector<2x8x128xf32>
    %238 = arith.addf %228, %237 : vector<2x8x128xf32>
    %239 = vector.extract_strided_slice %178 {offsets = [2, 0, 0], sizes = [2, 8, 128], strides = [1, 1, 1]} : vector<4x10x128xf32> to vector<2x8x128xf32>
    %240 = vector.broadcast %16 : vector<1x1x128xf32> to vector<2x8x128xf32>
    %241 = arith.mulf %239, %240 : vector<2x8x128xf32>
    %242 = arith.addf %232, %241 : vector<2x8x128xf32>
    %243 = vector.broadcast %43 : vector<1x1x128xf32> to vector<2x8x128xf32>
    %244 = arith.mulf %239, %243 : vector<2x8x128xf32>
    %245 = arith.addf %235, %244 : vector<2x8x128xf32>
    %246 = vector.broadcast %70 : vector<1x1x128xf32> to vector<2x8x128xf32>
    %247 = arith.mulf %239, %246 : vector<2x8x128xf32>
    %248 = arith.addf %238, %247 : vector<2x8x128xf32>
    %249 = vector.extract_strided_slice %178 {offsets = [2, 1, 0], sizes = [2, 8, 128], strides = [1, 1, 1]} : vector<4x10x128xf32> to vector<2x8x128xf32>
    %250 = vector.broadcast %17 : vector<1x1x128xf32> to vector<2x8x128xf32>
    %251 = arith.mulf %249, %250 : vector<2x8x128xf32>
    %252 = arith.addf %242, %251 : vector<2x8x128xf32>
    %253 = vector.broadcast %44 : vector<1x1x128xf32> to vector<2x8x128xf32>
    %254 = arith.mulf %249, %253 : vector<2x8x128xf32>
    %255 = arith.addf %245, %254 : vector<2x8x128xf32>
    %256 = vector.broadcast %71 : vector<1x1x128xf32> to vector<2x8x128xf32>
    %257 = arith.mulf %249, %256 : vector<2x8x128xf32>
    %258 = arith.addf %248, %257 : vector<2x8x128xf32>
    %259 = vector.extract_strided_slice %178 {offsets = [2, 2, 0], sizes = [2, 8, 128], strides = [1, 1, 1]} : vector<4x10x128xf32> to vector<2x8x128xf32>
    %260 = vector.broadcast %18 : vector<1x1x128xf32> to vector<2x8x128xf32>
    %261 = arith.mulf %259, %260 : vector<2x8x128xf32>
    %262 = arith.addf %252, %261 : vector<2x8x128xf32>
    %263 = vector.broadcast %45 : vector<1x1x128xf32> to vector<2x8x128xf32>
    %264 = arith.mulf %259, %263 : vector<2x8x128xf32>
    %265 = arith.addf %255, %264 : vector<2x8x128xf32>
    %266 = vector.broadcast %72 : vector<1x1x128xf32> to vector<2x8x128xf32>
    %267 = arith.mulf %259, %266 : vector<2x8x128xf32>
    %268 = arith.addf %258, %267 : vector<2x8x128xf32>
    %c2 = arith.constant 2 : index
    %c0_11 = arith.constant 0 : index
    %c0_12 = arith.constant 0 : index
    %c0_13 = arith.constant 0 : index
    %269 = vector.load %arg1[%c2, %c0_11, %c0_12, %c0_13] : memref<3x4x10x128xf32, #tpu.memory_space<vmem>>, vector<1x4x10x128xf32>
    %270 = vector.shape_cast %269 : vector<1x4x10x128xf32> to vector<4x10x128xf32>
    %271 = vector.extract_strided_slice %270 {offsets = [0, 0, 0], sizes = [2, 8, 128], strides = [1, 1, 1]} : vector<4x10x128xf32> to vector<2x8x128xf32>
    %272 = vector.broadcast %19 : vector<1x1x128xf32> to vector<2x8x128xf32>
    %273 = arith.mulf %271, %272 : vector<2x8x128xf32>
    %274 = arith.addf %262, %273 : vector<2x8x128xf32>
    %275 = vector.broadcast %46 : vector<1x1x128xf32> to vector<2x8x128xf32>
    %276 = arith.mulf %271, %275 : vector<2x8x128xf32>
    %277 = arith.addf %265, %276 : vector<2x8x128xf32>
    %278 = vector.broadcast %73 : vector<1x1x128xf32> to vector<2x8x128xf32>
    %279 = arith.mulf %271, %278 : vector<2x8x128xf32>
    %280 = arith.addf %268, %279 : vector<2x8x128xf32>
    %281 = vector.extract_strided_slice %270 {offsets = [0, 1, 0], sizes = [2, 8, 128], strides = [1, 1, 1]} : vector<4x10x128xf32> to vector<2x8x128xf32>
    %282 = vector.broadcast %20 : vector<1x1x128xf32> to vector<2x8x128xf32>
    %283 = arith.mulf %281, %282 : vector<2x8x128xf32>
    %284 = arith.addf %274, %283 : vector<2x8x128xf32>
    %285 = vector.broadcast %47 : vector<1x1x128xf32> to vector<2x8x128xf32>
    %286 = arith.mulf %281, %285 : vector<2x8x128xf32>
    %287 = arith.addf %277, %286 : vector<2x8x128xf32>
    %288 = vector.broadcast %74 : vector<1x1x128xf32> to vector<2x8x128xf32>
    %289 = arith.mulf %281, %288 : vector<2x8x128xf32>
    %290 = arith.addf %280, %289 : vector<2x8x128xf32>
    %291 = vector.extract_strided_slice %270 {offsets = [0, 2, 0], sizes = [2, 8, 128], strides = [1, 1, 1]} : vector<4x10x128xf32> to vector<2x8x128xf32>
    %292 = vector.broadcast %21 : vector<1x1x128xf32> to vector<2x8x128xf32>
    %293 = arith.mulf %291, %292 : vector<2x8x128xf32>
    %294 = arith.addf %284, %293 : vector<2x8x128xf32>
    %295 = vector.broadcast %48 : vector<1x1x128xf32> to vector<2x8x128xf32>
    %296 = arith.mulf %291, %295 : vector<2x8x128xf32>
    %297 = arith.addf %287, %296 : vector<2x8x128xf32>
    %298 = vector.broadcast %75 : vector<1x1x128xf32> to vector<2x8x128xf32>
    %299 = arith.mulf %291, %298 : vector<2x8x128xf32>
    %300 = arith.addf %290, %299 : vector<2x8x128xf32>
    %301 = vector.extract_strided_slice %270 {offsets = [1, 0, 0], sizes = [2, 8, 128], strides = [1, 1, 1]} : vector<4x10x128xf32> to vector<2x8x128xf32>
    %302 = vector.broadcast %22 : vector<1x1x128xf32> to vector<2x8x128xf32>
    %303 = arith.mulf %301, %302 : vector<2x8x128xf32>
    %304 = arith.addf %294, %303 : vector<2x8x128xf32>
    %305 = vector.broadcast %49 : vector<1x1x128xf32> to vector<2x8x128xf32>
    %306 = arith.mulf %301, %305 : vector<2x8x128xf32>
    %307 = arith.addf %297, %306 : vector<2x8x128xf32>
    %308 = vector.broadcast %76 : vector<1x1x128xf32> to vector<2x8x128xf32>
    %309 = arith.mulf %301, %308 : vector<2x8x128xf32>
    %310 = arith.addf %300, %309 : vector<2x8x128xf32>
    %311 = vector.extract_strided_slice %270 {offsets = [1, 1, 0], sizes = [2, 8, 128], strides = [1, 1, 1]} : vector<4x10x128xf32> to vector<2x8x128xf32>
    %312 = vector.broadcast %23 : vector<1x1x128xf32> to vector<2x8x128xf32>
    %313 = arith.mulf %311, %312 : vector<2x8x128xf32>
    %314 = arith.addf %304, %313 : vector<2x8x128xf32>
    %315 = vector.broadcast %50 : vector<1x1x128xf32> to vector<2x8x128xf32>
    %316 = arith.mulf %311, %315 : vector<2x8x128xf32>
    %317 = arith.addf %307, %316 : vector<2x8x128xf32>
    %318 = vector.broadcast %77 : vector<1x1x128xf32> to vector<2x8x128xf32>
    %319 = arith.mulf %311, %318 : vector<2x8x128xf32>
    %320 = arith.addf %310, %319 : vector<2x8x128xf32>
    %321 = vector.extract_strided_slice %270 {offsets = [1, 2, 0], sizes = [2, 8, 128], strides = [1, 1, 1]} : vector<4x10x128xf32> to vector<2x8x128xf32>
    %322 = vector.broadcast %24 : vector<1x1x128xf32> to vector<2x8x128xf32>
    %323 = arith.mulf %321, %322 : vector<2x8x128xf32>
    %324 = arith.addf %314, %323 : vector<2x8x128xf32>
    %325 = vector.broadcast %51 : vector<1x1x128xf32> to vector<2x8x128xf32>
    %326 = arith.mulf %321, %325 : vector<2x8x128xf32>
    %327 = arith.addf %317, %326 : vector<2x8x128xf32>
    %328 = vector.broadcast %78 : vector<1x1x128xf32> to vector<2x8x128xf32>
    %329 = arith.mulf %321, %328 : vector<2x8x128xf32>
    %330 = arith.addf %320, %329 : vector<2x8x128xf32>
    %331 = vector.extract_strided_slice %270 {offsets = [2, 0, 0], sizes = [2, 8, 128], strides = [1, 1, 1]} : vector<4x10x128xf32> to vector<2x8x128xf32>
    %332 = vector.broadcast %25 : vector<1x1x128xf32> to vector<2x8x128xf32>
    %333 = arith.mulf %331, %332 : vector<2x8x128xf32>
    %334 = arith.addf %324, %333 : vector<2x8x128xf32>
    %335 = vector.broadcast %52 : vector<1x1x128xf32> to vector<2x8x128xf32>
    %336 = arith.mulf %331, %335 : vector<2x8x128xf32>
    %337 = arith.addf %327, %336 : vector<2x8x128xf32>
    %338 = vector.broadcast %79 : vector<1x1x128xf32> to vector<2x8x128xf32>
    %339 = arith.mulf %331, %338 : vector<2x8x128xf32>
    %340 = arith.addf %330, %339 : vector<2x8x128xf32>
    %341 = vector.extract_strided_slice %270 {offsets = [2, 1, 0], sizes = [2, 8, 128], strides = [1, 1, 1]} : vector<4x10x128xf32> to vector<2x8x128xf32>
    %342 = vector.broadcast %26 : vector<1x1x128xf32> to vector<2x8x128xf32>
    %343 = arith.mulf %341, %342 : vector<2x8x128xf32>
    %344 = arith.addf %334, %343 : vector<2x8x128xf32>
    %345 = vector.broadcast %53 : vector<1x1x128xf32> to vector<2x8x128xf32>
    %346 = arith.mulf %341, %345 : vector<2x8x128xf32>
    %347 = arith.addf %337, %346 : vector<2x8x128xf32>
    %348 = vector.broadcast %80 : vector<1x1x128xf32> to vector<2x8x128xf32>
    %349 = arith.mulf %341, %348 : vector<2x8x128xf32>
    %350 = arith.addf %340, %349 : vector<2x8x128xf32>
    %351 = vector.extract_strided_slice %270 {offsets = [2, 2, 0], sizes = [2, 8, 128], strides = [1, 1, 1]} : vector<4x10x128xf32> to vector<2x8x128xf32>
    %352 = vector.broadcast %27 : vector<1x1x128xf32> to vector<2x8x128xf32>
    %353 = arith.mulf %351, %352 : vector<2x8x128xf32>
    %354 = arith.addf %344, %353 : vector<2x8x128xf32>
    %355 = vector.broadcast %54 : vector<1x1x128xf32> to vector<2x8x128xf32>
    %356 = arith.mulf %351, %355 : vector<2x8x128xf32>
    %357 = arith.addf %347, %356 : vector<2x8x128xf32>
    %358 = vector.broadcast %81 : vector<1x1x128xf32> to vector<2x8x128xf32>
    %359 = arith.mulf %351, %358 : vector<2x8x128xf32>
    %360 = arith.addf %350, %359 : vector<2x8x128xf32>
    %361 = vector.shape_cast %354 : vector<2x8x128xf32> to vector<1x2x8x128xf32>
    %c0_14 = arith.constant 0 : index
    %c0_15 = arith.constant 0 : index
    %c0_16 = arith.constant 0 : index
    %c0_17 = arith.constant 0 : index
    %c0_18 = arith.constant 0 : index
    %362 = vector.load %arg3[%c0_14, %c0_15, %c0_16, %c0_17, %c0_18] : memref<3x1x2x8x128xf32, #tpu.memory_space<vmem>>, vector<1x1x2x8x128xf32>
    %363 = vector.shape_cast %362 : vector<1x1x2x8x128xf32> to vector<1x2x8x128xf32>
    %364 = vector.shape_cast %361 : vector<1x2x8x128xf32> to vector<1x1x2x8x128xf32>
    tpu.vector_store %arg3[%c0_14, %c0_15, %c0_16, %c0_17, %c0_18], %364 {strides = array<i32>} : memref<3x1x2x8x128xf32, #tpu.memory_space<vmem>>, vector<1x1x2x8x128xf32>,
    %365 = vector.shape_cast %357 : vector<2x8x128xf32> to vector<1x2x8x128xf32>
    %c1_19 = arith.constant 1 : index
    %c0_20 = arith.constant 0 : index
    %c0_21 = arith.constant 0 : index
    %c0_22 = arith.constant 0 : index
    %c0_23 = arith.constant 0 : index
    %366 = vector.load %arg3[%c1_19, %c0_20, %c0_21, %c0_22, %c0_23] : memref<3x1x2x8x128xf32, #tpu.memory_space<vmem>>, vector<1x1x2x8x128xf32>
    %367 = vector.shape_cast %366 : vector<1x1x2x8x128xf32> to vector<1x2x8x128xf32>
    %368 = vector.shape_cast %365 : vector<1x2x8x128xf32> to vector<1x1x2x8x128xf32>
    tpu.vector_store %arg3[%c1_19, %c0_20, %c0_21, %c0_22, %c0_23], %368 {strides = array<i32>} : memref<3x1x2x8x128xf32, #tpu.memory_space<vmem>>, vector<1x1x2x8x128xf32>,
    %369 = vector.shape_cast %360 : vector<2x8x128xf32> to vector<1x2x8x128xf32>
    %c2_24 = arith.constant 2 : index
    %c0_25 = arith.constant 0 : index
    %c0_26 = arith.constant 0 : index
    %c0_27 = arith.constant 0 : index
    %c0_28 = arith.constant 0 : index
    %370 = vector.load %arg3[%c2_24, %c0_25, %c0_26, %c0_27, %c0_28] : memref<3x1x2x8x128xf32, #tpu.memory_space<vmem>>, vector<1x1x2x8x128xf32>
    %371 = vector.shape_cast %370 : vector<1x1x2x8x128xf32> to vector<1x2x8x128xf32>
    %372 = vector.shape_cast %369 : vector<1x2x8x128xf32> to vector<1x1x2x8x128xf32>
    tpu.vector_store %arg3[%c2_24, %c0_25, %c0_26, %c0_27, %c0_28], %372 {strides = array<i32>} : memref<3x1x2x8x128xf32, #tpu.memory_space<vmem>>, vector<1x1x2x8x128xf32>,
    return
  }
  func.func @transform_0(%arg0: i32) -> (i32, i32, i32, i32) {
    %c0_i32 = arith.constant 0 : i32
    %c0_i32_0 = arith.constant 0 : i32
    %c0_i32_1 = arith.constant 0 : i32
    %c0_i32_2 = arith.constant 0 : i32
    return %c0_i32, %c0_i32_0, %c0_i32_1, %arg0 : i32, i32, i32, i32
  }
  func.func @transform_1(%arg0: i32) -> (i32, i32, i32) {
    %c0_i32 = arith.constant 0 : i32
    %c0_i32_0 = arith.constant 0 : i32
    %c0_i32_1 = arith.constant 0 : i32
    return %c0_i32, %c0_i32_0, %arg0 : i32, i32, i32
  }
  func.func @transform_2(%arg0: i32) -> (i32, i32, i32, i32, i32) {
    %c0_i32 = arith.constant 0 : i32
    %c0_i32_0 = arith.constant 0 : i32
    %c0_i32_1 = arith.constant 0 : i32
    %c0_i32_2 = arith.constant 0 : i32
    %c0_i32_3 = arith.constant 0 : i32
    return %c0_i32, %c0_i32_0, %c0_i32_1, %c0_i32_2, %arg0 : i32, i32, i32, i32, i32
  }
}

</mosaic_0001>

<llo_original>
// kernel: voxel_perception_net.1
$region0: #{voxel_perception_net.1}
  #allocation0 [shape = 'u32[]', space=smem, size = 0x4, offset = 0x4, fixed_abs, tag = 'smem constant byte address 0x4 - core index']
  #allocation1 [shape = 'u32[144,128]{1,0:T(1,128)}', space=vmem, size = 0x12000, scoped, tag = 'internal scratch']
  %s0 = inlined_call_operand.vmem [shape: f32[3,4,10,128], index: 0, kind: input, shape index: {}]
  %s1 = inlined_call_operand.vmem [shape: f32[3,27,128], index: 1, kind: input, shape index: {}]
  %s2 = inlined_call_operand.vmem [shape: f32[3,1,2,8,128], index: 2, kind: output, shape index: {}]
  %s3 = sld [smem:[#allocation0]]
  $region18: #{voxel_perception_net.1} parent=0
    _
  %s5 = ssub.s32 1, %s3
  %s6 = scalar_select 0, %s5, %s3
  // Predicated region
  $region2: #{voxel_perception_net.1} parent=0 // pred_check
    _
  $region3: #{voxel_perception_net.1} parent=0 // pred_check_branch
    %8 = sbr.rel (0) target = $region5
  $region4: #{voxel_perception_net.1} parent=0 // pred_region
    _
  $region5: #{voxel_perception_net.1} parent=0 // pred_fallthru
    _
  // Predicated region
  $region6: #{voxel_perception_net.1} parent=0 // pred_check
    _
  $region7: #{voxel_perception_net.1} parent=0 // pred_check_branch
    %10 = sbr.rel (0) target = $region9
  $region8: #{voxel_perception_net.1} parent=0 // pred_region
    _
  $region9: #{voxel_perception_net.1} parent=0 // pred_fallthru
    _
  %v11 = vld [vmem:[%s1] sm:$0xff]
  %v12 = vld [vmem:[%s1 + $0x8] sm:$0xff]
  %v13 = vld [vmem:[%s1 + $0x10] sm:$0xff]
  %v14 = vld [vmem:[%s1 + $0x18] sm:$0x7]
  %v15 = vld [vmem:[%s1 + $0x20] sm:$0xff]
  %v16 = vld [vmem:[%s1 + $0x28] sm:$0xff]
  %v17 = vld [vmem:[%s1 + $0x30] sm:$0xff]
  %v18 = vld [vmem:[%s1 + $0x38] sm:$0x7]
  %v19 = vld [vmem:[%s1 + $0x40] sm:$0xff]
  %v20 = vld [vmem:[%s1 + $0x48] sm:$0xff]
  %v21 = vld [vmem:[%s1 + $0x50] sm:$0xff]
  %v22 = vld [vmem:[%s1 + $0x58] sm:$0x7]
  %v23 = vld [vmem:[%s0] sm:$0xff]
  %v24 = vld [vmem:[%s0 + $0x8] sm:$0x3]
  %v25 = vld [vmem:[%s0 + $0x10] sm:$0xff]
  %v26 = vld [vmem:[%s0 + $0x18] sm:$0x3]
  %v27 = vld [vmem:[%s0 + $0x20] sm:$0xff]
  %v28 = vld [vmem:[%s0 + $0x28] sm:$0x3]
  %v29 = vld [vmem:[%s0 + $0x30] sm:$0xff]
  %v30 = vld [vmem:[%s0 + $0x38] sm:$0x3]
  %v31 = vlaneseq
  %v32 = vshrl.u32 %v31, 7
  %v33 = vsub.s32 0, %v32
  %v34 = vrot.slane %v11, %v33
  %v35 = vmul.f32 %v23, %v34
  %v36 = vmul.f32 %v25, %v34
  %v37 = vadd.f32 %v35, 0.0
  %v38 = vadd.f32 %v36, 0.0
  %v39 = vlaneseq
  %v40 = vshrl.u32 %v39, 7
  %v41 = vsub.s32 0, %v40
  %v42 = vrot.slane %v15, %v41
  %v43 = vmul.f32 %v23, %v42
  %v44 = vmul.f32 %v25, %v42
  %v45 = vadd.f32 %v43, 0.0
  %v46 = vadd.f32 %v44, 0.0
  %v47 = vlaneseq
  %v48 = vshrl.u32 %v47, 7
  %v49 = vsub.s32 0, %v48
  %v50 = vrot.slane %v19, %v49
  %v51 = vmul.f32 %v23, %v50
  %v52 = vmul.f32 %v25, %v50
  %v53 = vadd.f32 %v51, 0.0
  %v54 = vadd.f32 %v52, 0.0
  %v55 = vlaneseq
  %v56 = vshrl.u32 %v55, 7
  %v57 = vsub.s32 1, %v56
  %v58 = vrot.slane %v11, %v57
  %v59 = vmul.f32 %v23, %v58
  %v60 = vmul.f32 %v24, %v58
  %v61 = vmul.f32 %v25, %v58
  %v62 = vmul.f32 %v26, %v58
  %vm67 = vcmask 1046528
  %v68 = vrot.slane %v59, 1
  %v69 = vrot.slane %v60, 1
  %v70 = vsel %vm67, %v68, %v69
  %v71 = vrot.slane %v61, 1
  %v72 = vrot.slane %v62, 1
  %v73 = vsel %vm67, %v71, %v72
  %v76 = vadd.f32 %v37, %v70
  %v77 = vadd.f32 %v38, %v73
  %v78 = vlaneseq
  %v79 = vshrl.u32 %v78, 7
  %v80 = vsub.s32 1, %v79
  %v81 = vrot.slane %v15, %v80
  %v82 = vmul.f32 %v23, %v81
  %v83 = vmul.f32 %v24, %v81
  %v84 = vmul.f32 %v25, %v81
  %v85 = vmul.f32 %v26, %v81
  %v90 = vrot.slane %v82, 1
  %v91 = vrot.slane %v83, 1
  %v92 = vsel %vm67, %v90, %v91
  %v93 = vrot.slane %v84, 1
  %v94 = vrot.slane %v85, 1
  %v95 = vsel %vm67, %v93, %v94
  %v98 = vadd.f32 %v45, %v92
  %v99 = vadd.f32 %v46, %v95
  %v100 = vlaneseq
  %v101 = vshrl.u32 %v100, 7
  %v102 = vsub.s32 1, %v101
  %v103 = vrot.slane %v19, %v102
  %v104 = vmul.f32 %v23, %v103
  %v105 = vmul.f32 %v24, %v103
  %v106 = vmul.f32 %v25, %v103
  %v107 = vmul.f32 %v26, %v103
  %v112 = vrot.slane %v104, 1
  %v113 = vrot.slane %v105, 1
  %v114 = vsel %vm67, %v112, %v113
  %v115 = vrot.slane %v106, 1
  %v116 = vrot.slane %v107, 1
  %v117 = vsel %vm67, %v115, %v116
  %v120 = vadd.f32 %v53, %v114
  %v121 = vadd.f32 %v54, %v117
  %v122 = vlaneseq
  %v123 = vshrl.u32 %v122, 7
  %v124 = vsub.s32 2, %v123
  %v125 = vrot.slane %v11, %v124
  %v126 = vmul.f32 %v23, %v125
  %v127 = vmul.f32 %v24, %v125
  %v128 = vmul.f32 %v25, %v125
  %v129 = vmul.f32 %v26, %v125
  %vm134 = vcmask 1045504
  %v135 = vrot.slane %v126, 2
  %v136 = vrot.slane %v127, 2
  %v137 = vsel %vm134, %v135, %v136
  %v138 = vrot.slane %v128, 2
  %v139 = vrot.slane %v129, 2
  %v140 = vsel %vm134, %v138, %v139
  %v143 = vadd.f32 %v76, %v137
  %v144 = vadd.f32 %v77, %v140
  %v145 = vlaneseq
  %v146 = vshrl.u32 %v145, 7
  %v147 = vsub.s32 2, %v146
  %v148 = vrot.slane %v15, %v147
  %v149 = vmul.f32 %v23, %v148
  %v150 = vmul.f32 %v24, %v148
  %v151 = vmul.f32 %v25, %v148
  %v152 = vmul.f32 %v26, %v148
  %v157 = vrot.slane %v149, 2
  %v158 = vrot.slane %v150, 2
  %v159 = vsel %vm134, %v157, %v158
  %v160 = vrot.slane %v151, 2
  %v161 = vrot.slane %v152, 2
  %v162 = vsel %vm134, %v160, %v161
  %v165 = vadd.f32 %v98, %v159
  %v166 = vadd.f32 %v99, %v162
  %v167 = vlaneseq
  %v168 = vshrl.u32 %v167, 7
  %v169 = vsub.s32 2, %v168
  %v170 = vrot.slane %v19, %v169
  %v171 = vmul.f32 %v23, %v170
  %v172 = vmul.f32 %v24, %v170
  %v173 = vmul.f32 %v25, %v170
  %v174 = vmul.f32 %v26, %v170
  %v179 = vrot.slane %v171, 2
  %v180 = vrot.slane %v172, 2
  %v181 = vsel %vm134, %v179, %v180
  %v182 = vrot.slane %v173, 2
  %v183 = vrot.slane %v174, 2
  %v184 = vsel %vm134, %v182, %v183
  %v187 = vadd.f32 %v120, %v181
  %v188 = vadd.f32 %v121, %v184
  %v189 = vlaneseq
  %v190 = vshrl.u32 %v189, 7
  %v191 = vsub.s32 3, %v190
  %v192 = vrot.slane %v11, %v191
  %v193 = vmul.f32 %v25, %v192
  %v194 = vmul.f32 %v27, %v192
  %v195 = vadd.f32 %v143, %v193
  %v196 = vadd.f32 %v144, %v194
  %v197 = vlaneseq
  %v198 = vshrl.u32 %v197, 7
  %v199 = vsub.s32 3, %v198
  %v200 = vrot.slane %v15, %v199
  %v201 = vmul.f32 %v25, %v200
  %v202 = vmul.f32 %v27, %v200
  %v203 = vadd.f32 %v165, %v201
  %v204 = vadd.f32 %v166, %v202
  %v205 = vlaneseq
  %v206 = vshrl.u32 %v205, 7
  %v207 = vsub.s32 3, %v206
  %v208 = vrot.slane %v19, %v207
  %v209 = vmul.f32 %v25, %v208
  %v210 = vmul.f32 %v27, %v208
  %v211 = vadd.f32 %v187, %v209
  %v212 = vadd.f32 %v188, %v210
  %v213 = vlaneseq
  %v214 = vshrl.u32 %v213, 7
  %v215 = vsub.s32 4, %v214
  %v216 = vrot.slane %v11, %v215
  %v217 = vmul.f32 %v25, %v216
  %v218 = vmul.f32 %v26, %v216
  %v219 = vmul.f32 %v27, %v216
  %v220 = vmul.f32 %v28, %v216
  %v225 = vrot.slane %v217, 1
  %v226 = vrot.slane %v218, 1
  %v227 = vsel %vm67, %v225, %v226
  %v228 = vrot.slane %v219, 1
  %v229 = vrot.slane %v220, 1
  %v230 = vsel %vm67, %v228, %v229
  %v233 = vadd.f32 %v195, %v227
  %v234 = vadd.f32 %v196, %v230
  %v235 = vlaneseq
  %v236 = vshrl.u32 %v235, 7
  %v237 = vsub.s32 4, %v236
  %v238 = vrot.slane %v15, %v237
  %v239 = vmul.f32 %v25, %v238
  %v240 = vmul.f32 %v26, %v238
  %v241 = vmul.f32 %v27, %v238
  %v242 = vmul.f32 %v28, %v238
  %v247 = vrot.slane %v239, 1
  %v248 = vrot.slane %v240, 1
  %v249 = vsel %vm67, %v247, %v248
  %v250 = vrot.slane %v241, 1
  %v251 = vrot.slane %v242, 1
  %v252 = vsel %vm67, %v250, %v251
  %v255 = vadd.f32 %v203, %v249
  %v256 = vadd.f32 %v204, %v252
  %v257 = vlaneseq
  %v258 = vshrl.u32 %v257, 7
  %v259 = vsub.s32 4, %v258
  %v260 = vrot.slane %v19, %v259
  %v261 = vmul.f32 %v25, %v260
  %v262 = vmul.f32 %v26, %v260
  %v263 = vmul.f32 %v27, %v260
  %v264 = vmul.f32 %v28, %v260
  %v269 = vrot.slane %v261, 1
  %v270 = vrot.slane %v262, 1
  %v271 = vsel %vm67, %v269, %v270
  %v272 = vrot.slane %v263, 1
  %v273 = vrot.slane %v264, 1
  %v274 = vsel %vm67, %v272, %v273
  %v277 = vadd.f32 %v211, %v271
  %v278 = vadd.f32 %v212, %v274
  %v279 = vlaneseq
  %v280 = vshrl.u32 %v279, 7
  %v281 = vsub.s32 5, %v280
  %v282 = vrot.slane %v11, %v281
  %v283 = vmul.f32 %v25, %v282
  %v284 = vmul.f32 %v26, %v282
  %v285 = vmul.f32 %v27, %v282
  %v286 = vmul.f32 %v28, %v282
  %v291 = vrot.slane %v283, 2
  %v292 = vrot.slane %v284, 2
  %v293 = vsel %vm134, %v291, %v292
  %v294 = vrot.slane %v285, 2
  %v295 = vrot.slane %v286, 2
  %v296 = vsel %vm134, %v294, %v295
  %v299 = vadd.f32 %v233, %v293
  %v300 = vadd.f32 %v234, %v296
  %v301 = vlaneseq
  %v302 = vshrl.u32 %v301, 7
  %v303 = vsub.s32 5, %v302
  %v304 = vrot.slane %v15, %v303
  %v305 = vmul.f32 %v25, %v304
  %v306 = vmul.f32 %v26, %v304
  %v307 = vmul.f32 %v27, %v304
  %v308 = vmul.f32 %v28, %v304
  %v313 = vrot.slane %v305, 2
  %v314 = vrot.slane %v306, 2
  %v315 = vsel %vm134, %v313, %v314
  %v316 = vrot.slane %v307, 2
  %v317 = vrot.slane %v308, 2
  %v318 = vsel %vm134, %v316, %v317
  %v321 = vadd.f32 %v255, %v315
  %v322 = vadd.f32 %v256, %v318
  %v323 = vlaneseq
  %v324 = vshrl.u32 %v323, 7
  %v325 = vsub.s32 5, %v324
  %v326 = vrot.slane %v19, %v325
  %v327 = vmul.f32 %v25, %v326
  %v328 = vmul.f32 %v26, %v326
  %v329 = vmul.f32 %v27, %v326
  %v330 = vmul.f32 %v28, %v326
  %v335 = vrot.slane %v327, 2
  %v336 = vrot.slane %v328, 2
  %v337 = vsel %vm134, %v335, %v336
  %v338 = vrot.slane %v329, 2
  %v339 = vrot.slane %v330, 2
  %v340 = vsel %vm134, %v338, %v339
  %v343 = vadd.f32 %v277, %v337
  %v344 = vadd.f32 %v278, %v340
  %v345 = vlaneseq
  %v346 = vshrl.u32 %v345, 7
  %v347 = vsub.s32 6, %v346
  %v348 = vrot.slane %v11, %v347
  %v349 = vmul.f32 %v27, %v348
  %v350 = vmul.f32 %v29, %v348
  %v351 = vadd.f32 %v299, %v349
  %v352 = vadd.f32 %v300, %v350
  %v353 = vlaneseq
  %v354 = vshrl.u32 %v353, 7
  %v355 = vsub.s32 6, %v354
  %v356 = vrot.slane %v15, %v355
  %v357 = vmul.f32 %v27, %v356
  %v358 = vmul.f32 %v29, %v356
  %v359 = vadd.f32 %v321, %v357
  %v360 = vadd.f32 %v322, %v358
  %v361 = vlaneseq
  %v362 = vshrl.u32 %v361, 7
  %v363 = vsub.s32 6, %v362
  %v364 = vrot.slane %v19, %v363
  %v365 = vmul.f32 %v27, %v364
  %v366 = vmul.f32 %v29, %v364
  %v367 = vadd.f32 %v343, %v365
  %v368 = vadd.f32 %v344, %v366
  %v369 = vlaneseq
  %v370 = vshrl.u32 %v369, 7
  %v371 = vsub.s32 7, %v370
  %v372 = vrot.slane %v11, %v371
  %v373 = vmul.f32 %v27, %v372
  %v374 = vmul.f32 %v28, %v372
  %v375 = vmul.f32 %v29, %v372
  %v376 = vmul.f32 %v30, %v372
  %v381 = vrot.slane %v373, 1
  %v382 = vrot.slane %v374, 1
  %v383 = vsel %vm67, %v381, %v382
  %v384 = vrot.slane %v375, 1
  %v385 = vrot.slane %v376, 1
  %v386 = vsel %vm67, %v384, %v385
  %v389 = vadd.f32 %v351, %v383
  %v390 = vadd.f32 %v352, %v386
  %v391 = vlaneseq
  %v392 = vshrl.u32 %v391, 7
  %v393 = vsub.s32 7, %v392
  %v394 = vrot.slane %v15, %v393
  %v395 = vmul.f32 %v27, %v394
  %v396 = vmul.f32 %v28, %v394
  %v397 = vmul.f32 %v29, %v394
  %v398 = vmul.f32 %v30, %v394
  %v403 = vrot.slane %v395, 1
  %v404 = vrot.slane %v396, 1
  %v405 = vsel %vm67, %v403, %v404
  %v406 = vrot.slane %v397, 1
  %v407 = vrot.slane %v398, 1
  %v408 = vsel %vm67, %v406, %v407
  %v411 = vadd.f32 %v359, %v405
  %v412 = vadd.f32 %v360, %v408
  %v413 = vlaneseq
  %v414 = vshrl.u32 %v413, 7
  %v415 = vsub.s32 7, %v414
  %v416 = vrot.slane %v19, %v415
  %v417 = vmul.f32 %v27, %v416
  %v418 = vmul.f32 %v28, %v416
  %v419 = vmul.f32 %v29, %v416
  %v420 = vmul.f32 %v30, %v416
  %v425 = vrot.slane %v417, 1
  %v426 = vrot.slane %v418, 1
  %v427 = vsel %vm67, %v425, %v426
  %v428 = vrot.slane %v419, 1
  %v429 = vrot.slane %v420, 1
  %v430 = vsel %vm67, %v428, %v429
  %v433 = vadd.f32 %v367, %v427
  %v434 = vadd.f32 %v368, %v430
  %v435 = vlaneseq
  %v436 = vshrl.u32 %v435, 7
  %v437 = vsub.s32 0, %v436
  %v438 = vrot.slane %v12, %v437
  %v439 = vmul.f32 %v27, %v438
  %v440 = vmul.f32 %v28, %v438
  %v441 = vmul.f32 %v29, %v438
  %v442 = vmul.f32 %v30, %v438
  %v447 = vrot.slane %v439, 2
  %v448 = vrot.slane %v440, 2
  %v449 = vsel %vm134, %v447, %v448
  %v450 = vrot.slane %v441, 2
  %v451 = vrot.slane %v442, 2
  %v452 = vsel %vm134, %v450, %v451
  %v455 = vadd.f32 %v389, %v449
  %v456 = vadd.f32 %v390, %v452
  %v457 = vlaneseq
  %v458 = vshrl.u32 %v457, 7
  %v459 = vsub.s32 0, %v458
  %v460 = vrot.slane %v16, %v459
  %v461 = vmul.f32 %v27, %v460
  %v462 = vmul.f32 %v28, %v460
  %v463 = vmul.f32 %v29, %v460
  %v464 = vmul.f32 %v30, %v460
  %v469 = vrot.slane %v461, 2
  %v470 = vrot.slane %v462, 2
  %v471 = vsel %vm134, %v469, %v470
  %v472 = vrot.slane %v463, 2
  %v473 = vrot.slane %v464, 2
  %v474 = vsel %vm134, %v472, %v473
  %v477 = vadd.f32 %v411, %v471
  %v478 = vadd.f32 %v412, %v474
  %v479 = vlaneseq
  %v480 = vshrl.u32 %v479, 7
  %v481 = vsub.s32 0, %v480
  %v482 = vrot.slane %v20, %v481
  %v483 = vmul.f32 %v27, %v482
  %v484 = vmul.f32 %v28, %v482
  %v485 = vmul.f32 %v29, %v482
  %v486 = vmul.f32 %v30, %v482
  %v491 = vrot.slane %v483, 2
  %v492 = vrot.slane %v484, 2
  %v493 = vsel %vm134, %v491, %v492
  %v494 = vrot.slane %v485, 2
  %v495 = vrot.slane %v486, 2
  %v496 = vsel %vm134, %v494, %v495
  %v499 = vadd.f32 %v433, %v493
  %v500 = vadd.f32 %v434, %v496
  %s501 = scalar_lea.vmem %s0, 64
  %v502 = vld [vmem:[%s501] sm:$0xff]
  %v503 = vld [vmem:[%s501 + $0x8] sm:$0x3]
  %v504 = vld [vmem:[%s501 + $0x10] sm:$0xff]
  %v505 = vld [vmem:[%s501 + $0x18] sm:$0x3]
  %v506 = vld [vmem:[%s501 + $0x20] sm:$0xff]
  %v507 = vld [vmem:[%s501 + $0x28] sm:$0x3]
  %v508 = vld [vmem:[%s501 + $0x30] sm:$0xff]
  %v509 = vld [vmem:[%s501 + $0x38] sm:$0x3]
  %v510 = vlaneseq
  %v511 = vshrl.u32 %v510, 7
  %v512 = vsub.s32 1, %v511
  %v513 = vrot.slane %v12, %v512
  %v514 = vmul.f32 %v502, %v513
  %v515 = vmul.f32 %v504, %v513
  %v516 = vadd.f32 %v455, %v514
  %v517 = vadd.f32 %v456, %v515
  %v518 = vlaneseq
  %v519 = vshrl.u32 %v518, 7
  %v520 = vsub.s32 1, %v519
  %v521 = vrot.slane %v16, %v520
  %v522 = vmul.f32 %v502, %v521
  %v523 = vmul.f32 %v504, %v521
  %v524 = vadd.f32 %v477, %v522
  %v525 = vadd.f32 %v478, %v523
  %v526 = vlaneseq
  %v527 = vshrl.u32 %v526, 7
  %v528 = vsub.s32 1, %v527
  %v529 = vrot.slane %v20, %v528
  %v530 = vmul.f32 %v502, %v529
  %v531 = vmul.f32 %v504, %v529
  %v532 = vadd.f32 %v499, %v530
  %v533 = vadd.f32 %v500, %v531
  %v534 = vlaneseq
  %v535 = vshrl.u32 %v534, 7
  %v536 = vsub.s32 2, %v535
  %v537 = vrot.slane %v12, %v536
  %v538 = vmul.f32 %v502, %v537
  %v539 = vmul.f32 %v503, %v537
  %v540 = vmul.f32 %v504, %v537
  %v541 = vmul.f32 %v505, %v537
  %v546 = vrot.slane %v538, 1
  %v547 = vrot.slane %v539, 1
  %v548 = vsel %vm67, %v546, %v547
  %v549 = vrot.slane %v540, 1
  %v550 = vrot.slane %v541, 1
  %v551 = vsel %vm67, %v549, %v550
  %v554 = vadd.f32 %v516, %v548
  %v555 = vadd.f32 %v517, %v551
  %v556 = vlaneseq
  %v557 = vshrl.u32 %v556, 7
  %v558 = vsub.s32 2, %v557
  %v559 = vrot.slane %v16, %v558
  %v560 = vmul.f32 %v502, %v559
  %v561 = vmul.f32 %v503, %v559
  %v562 = vmul.f32 %v504, %v559
  %v563 = vmul.f32 %v505, %v559
  %v568 = vrot.slane %v560, 1
  %v569 = vrot.slane %v561, 1
  %v570 = vsel %vm67, %v568, %v569
  %v571 = vrot.slane %v562, 1
  %v572 = vrot.slane %v563, 1
  %v573 = vsel %vm67, %v571, %v572
  %v576 = vadd.f32 %v524, %v570
  %v577 = vadd.f32 %v525, %v573
  %v578 = vlaneseq
  %v579 = vshrl.u32 %v578, 7
  %v580 = vsub.s32 2, %v579
  %v581 = vrot.slane %v20, %v580
  %v582 = vmul.f32 %v502, %v581
  %v583 = vmul.f32 %v503, %v581
  %v584 = vmul.f32 %v504, %v581
  %v585 = vmul.f32 %v505, %v581
  %v590 = vrot.slane %v582, 1
  %v591 = vrot.slane %v583, 1
  %v592 = vsel %vm67, %v590, %v591
  %v593 = vrot.slane %v584, 1
  %v594 = vrot.slane %v585, 1
  %v595 = vsel %vm67, %v593, %v594
  %v598 = vadd.f32 %v532, %v592
  %v599 = vadd.f32 %v533, %v595
  %v600 = vlaneseq
  %v601 = vshrl.u32 %v600, 7
  %v602 = vsub.s32 3, %v601
  %v603 = vrot.slane %v12, %v602
  %v604 = vmul.f32 %v502, %v603
  %v605 = vmul.f32 %v503, %v603
  %v606 = vmul.f32 %v504, %v603
  %v607 = vmul.f32 %v505, %v603
  %v612 = vrot.slane %v604, 2
  %v613 = vrot.slane %v605, 2
  %v614 = vsel %vm134, %v612, %v613
  %v615 = vrot.slane %v606, 2
  %v616 = vrot.slane %v607, 2
  %v617 = vsel %vm134, %v615, %v616
  %v620 = vadd.f32 %v554, %v614
  %v621 = vadd.f32 %v555, %v617
  %v622 = vlaneseq
  %v623 = vshrl.u32 %v622, 7
  %v624 = vsub.s32 3, %v623
  %v625 = vrot.slane %v16, %v624
  %v626 = vmul.f32 %v502, %v625
  %v627 = vmul.f32 %v503, %v625
  %v628 = vmul.f32 %v504, %v625
  %v629 = vmul.f32 %v505, %v625
  %v634 = vrot.slane %v626, 2
  %v635 = vrot.slane %v627, 2
  %v636 = vsel %vm134, %v634, %v635
  %v637 = vrot.slane %v628, 2
  %v638 = vrot.slane %v629, 2
  %v639 = vsel %vm134, %v637, %v638
  %v642 = vadd.f32 %v576, %v636
  %v643 = vadd.f32 %v577, %v639
  %v644 = vlaneseq
  %v645 = vshrl.u32 %v644, 7
  %v646 = vsub.s32 3, %v645
  %v647 = vrot.slane %v20, %v646
  %v648 = vmul.f32 %v502, %v647
  %v649 = vmul.f32 %v503, %v647
  %v650 = vmul.f32 %v504, %v647
  %v651 = vmul.f32 %v505, %v647
  %v656 = vrot.slane %v648, 2
  %v657 = vrot.slane %v649, 2
  %v658 = vsel %vm134, %v656, %v657
  %v659 = vrot.slane %v650, 2
  %v660 = vrot.slane %v651, 2
  %v661 = vsel %vm134, %v659, %v660
  %v664 = vadd.f32 %v598, %v658
  %v665 = vadd.f32 %v599, %v661
  %v666 = vlaneseq
  %v667 = vshrl.u32 %v666, 7
  %v668 = vsub.s32 4, %v667
  %v669 = vrot.slane %v12, %v668
  %v670 = vmul.f32 %v504, %v669
  %v671 = vmul.f32 %v506, %v669
  %v672 = vadd.f32 %v620, %v670
  %v673 = vadd.f32 %v621, %v671
  %v674 = vlaneseq
  %v675 = vshrl.u32 %v674, 7
  %v676 = vsub.s32 4, %v675
  %v677 = vrot.slane %v16, %v676
  %v678 = vmul.f32 %v504, %v677
  %v679 = vmul.f32 %v506, %v677
  %v680 = vadd.f32 %v642, %v678
  %v681 = vadd.f32 %v643, %v679
  %v682 = vlaneseq
  %v683 = vshrl.u32 %v682, 7
  %v684 = vsub.s32 4, %v683
  %v685 = vrot.slane %v20, %v684
  %v686 = vmul.f32 %v504, %v685
  %v687 = vmul.f32 %v506, %v685
  %v688 = vadd.f32 %v664, %v686
  %v689 = vadd.f32 %v665, %v687
  %v690 = vlaneseq
  %v691 = vshrl.u32 %v690, 7
  %v692 = vsub.s32 5, %v691
  %v693 = vrot.slane %v12, %v692
  %v694 = vmul.f32 %v504, %v693
  %v695 = vmul.f32 %v505, %v693
  %v696 = vmul.f32 %v506, %v693
  %v697 = vmul.f32 %v507, %v693
  %v702 = vrot.slane %v694, 1
  %v703 = vrot.slane %v695, 1
  %v704 = vsel %vm67, %v702, %v703
  %v705 = vrot.slane %v696, 1
  %v706 = vrot.slane %v697, 1
  %v707 = vsel %vm67, %v705, %v706
  %v710 = vadd.f32 %v672, %v704
  %v711 = vadd.f32 %v673, %v707
  %v712 = vlaneseq
  %v713 = vshrl.u32 %v712, 7
  %v714 = vsub.s32 5, %v713
  %v715 = vrot.slane %v16, %v714
  %v716 = vmul.f32 %v504, %v715
  %v717 = vmul.f32 %v505, %v715
  %v718 = vmul.f32 %v506, %v715
  %v719 = vmul.f32 %v507, %v715
  %v724 = vrot.slane %v716, 1
  %v725 = vrot.slane %v717, 1
  %v726 = vsel %vm67, %v724, %v725
  %v727 = vrot.slane %v718, 1
  %v728 = vrot.slane %v719, 1
  %v729 = vsel %vm67, %v727, %v728
  %v732 = vadd.f32 %v680, %v726
  %v733 = vadd.f32 %v681, %v729
  %v734 = vlaneseq
  %v735 = vshrl.u32 %v734, 7
  %v736 = vsub.s32 5, %v735
  %v737 = vrot.slane %v20, %v736
  %v738 = vmul.f32 %v504, %v737
  %v739 = vmul.f32 %v505, %v737
  %v740 = vmul.f32 %v506, %v737
  %v741 = vmul.f32 %v507, %v737
  %v746 = vrot.slane %v738, 1
  %v747 = vrot.slane %v739, 1
  %v748 = vsel %vm67, %v746, %v747
  %v749 = vrot.slane %v740, 1
  %v750 = vrot.slane %v741, 1
  %v751 = vsel %vm67, %v749, %v750
  %v754 = vadd.f32 %v688, %v748
  %v755 = vadd.f32 %v689, %v751
  %v756 = vlaneseq
  %v757 = vshrl.u32 %v756, 7
  %v758 = vsub.s32 6, %v757
  %v759 = vrot.slane %v12, %v758
  %v760 = vmul.f32 %v504, %v759
  %v761 = vmul.f32 %v505, %v759
  %v762 = vmul.f32 %v506, %v759
  %v763 = vmul.f32 %v507, %v759
  %v768 = vrot.slane %v760, 2
  %v769 = vrot.slane %v761, 2
  %v770 = vsel %vm134, %v768, %v769
  %v771 = vrot.slane %v762, 2
  %v772 = vrot.slane %v763, 2
  %v773 = vsel %vm134, %v771, %v772
  %v776 = vadd.f32 %v710, %v770
  %v777 = vadd.f32 %v711, %v773
  %v778 = vlaneseq
  %v779 = vshrl.u32 %v778, 7
  %v780 = vsub.s32 6, %v779
  %v781 = vrot.slane %v16, %v780
  %v782 = vmul.f32 %v504, %v781
  %v783 = vmul.f32 %v505, %v781
  %v784 = vmul.f32 %v506, %v781
  %v785 = vmul.f32 %v507, %v781
  %v790 = vrot.slane %v782, 2
  %v791 = vrot.slane %v783, 2
  %v792 = vsel %vm134, %v790, %v791
  %v793 = vrot.slane %v784, 2
  %v794 = vrot.slane %v785, 2
  %v795 = vsel %vm134, %v793, %v794
  %v798 = vadd.f32 %v732, %v792
  %v799 = vadd.f32 %v733, %v795
  %v800 = vlaneseq
  %v801 = vshrl.u32 %v800, 7
  %v802 = vsub.s32 6, %v801
  %v803 = vrot.slane %v20, %v802
  %v804 = vmul.f32 %v504, %v803
  %v805 = vmul.f32 %v505, %v803
  %v806 = vmul.f32 %v506, %v803
  %v807 = vmul.f32 %v507, %v803
  %v812 = vrot.slane %v804, 2
  %v813 = vrot.slane %v805, 2
  %v814 = vsel %vm134, %v812, %v813
  %v815 = vrot.slane %v806, 2
  %v816 = vrot.slane %v807, 2
  %v817 = vsel %vm134, %v815, %v816
  %v820 = vadd.f32 %v754, %v814
  %v821 = vadd.f32 %v755, %v817
  %v822 = vlaneseq
  %v823 = vshrl.u32 %v822, 7
  %v824 = vsub.s32 7, %v823
  %v825 = vrot.slane %v12, %v824
  %v826 = vmul.f32 %v506, %v825
  %v827 = vmul.f32 %v508, %v825
  %v828 = vadd.f32 %v776, %v826
  %v829 = vadd.f32 %v777, %v827
  %v830 = vlaneseq
  %v831 = vshrl.u32 %v830, 7
  %v832 = vsub.s32 7, %v831
  %v833 = vrot.slane %v16, %v832
  %v834 = vmul.f32 %v506, %v833
  %v835 = vmul.f32 %v508, %v833
  %v836 = vadd.f32 %v798, %v834
  %v837 = vadd.f32 %v799, %v835
  %v838 = vlaneseq
  %v839 = vshrl.u32 %v838, 7
  %v840 = vsub.s32 7, %v839
  %v841 = vrot.slane %v20, %v840
  %v842 = vmul.f32 %v506, %v841
  %v843 = vmul.f32 %v508, %v841
  %v844 = vadd.f32 %v820, %v842
  %v845 = vadd.f32 %v821, %v843
  %v846 = vlaneseq
  %v847 = vshrl.u32 %v846, 7
  %v848 = vsub.s32 0, %v847
  %v849 = vrot.slane %v13, %v848
  %v850 = vmul.f32 %v506, %v849
  %v851 = vmul.f32 %v507, %v849
  %v852 = vmul.f32 %v508, %v849
  %v853 = vmul.f32 %v509, %v849
  %v858 = vrot.slane %v850, 1
  %v859 = vrot.slane %v851, 1
  %v860 = vsel %vm67, %v858, %v859
  %v861 = vrot.slane %v852, 1
  %v862 = vrot.slane %v853, 1
  %v863 = vsel %vm67, %v861, %v862
  %v866 = vadd.f32 %v828, %v860
  %v867 = vadd.f32 %v829, %v863
  %v868 = vlaneseq
  %v869 = vshrl.u32 %v868, 7
  %v870 = vsub.s32 0, %v869
  %v871 = vrot.slane %v17, %v870
  %v872 = vmul.f32 %v506, %v871
  %v873 = vmul.f32 %v507, %v871
  %v874 = vmul.f32 %v508, %v871
  %v875 = vmul.f32 %v509, %v871
  %v880 = vrot.slane %v872, 1
  %v881 = vrot.slane %v873, 1
  %v882 = vsel %vm67, %v880, %v881
  %v883 = vrot.slane %v874, 1
  %v884 = vrot.slane %v875, 1
  %v885 = vsel %vm67, %v883, %v884
  %v888 = vadd.f32 %v836, %v882
  %v889 = vadd.f32 %v837, %v885
  %v890 = vlaneseq
  %v891 = vshrl.u32 %v890, 7
  %v892 = vsub.s32 0, %v891
  %v893 = vrot.slane %v21, %v892
  %v894 = vmul.f32 %v506, %v893
  %v895 = vmul.f32 %v507, %v893
  %v896 = vmul.f32 %v508, %v893
  %v897 = vmul.f32 %v509, %v893
  %v902 = vrot.slane %v894, 1
  %v903 = vrot.slane %v895, 1
  %v904 = vsel %vm67, %v902, %v903
  %v905 = vrot.slane %v896, 1
  %v906 = vrot.slane %v897, 1
  %v907 = vsel %vm67, %v905, %v906
  %v910 = vadd.f32 %v844, %v904
  %v911 = vadd.f32 %v845, %v907
  %v912 = vlaneseq
  %v913 = vshrl.u32 %v912, 7
  %v914 = vsub.s32 1, %v913
  %v915 = vrot.slane %v13, %v914
  %v916 = vmul.f32 %v506, %v915
  %v917 = vmul.f32 %v507, %v915
  %v918 = vmul.f32 %v508, %v915
  %v919 = vmul.f32 %v509, %v915
  %v924 = vrot.slane %v916, 2
  %v925 = vrot.slane %v917, 2
  %v926 = vsel %vm134, %v924, %v925
  %v927 = vrot.slane %v918, 2
  %v928 = vrot.slane %v919, 2
  %v929 = vsel %vm134, %v927, %v928
  %v932 = vadd.f32 %v866, %v926
  %v933 = vadd.f32 %v867, %v929
  %v934 = vlaneseq
  %v935 = vshrl.u32 %v934, 7
  %v936 = vsub.s32 1, %v935
  %v937 = vrot.slane %v17, %v936
  %v938 = vmul.f32 %v506, %v937
  %v939 = vmul.f32 %v507, %v937
  %v940 = vmul.f32 %v508, %v937
  %v941 = vmul.f32 %v509, %v937
  %v946 = vrot.slane %v938, 2
  %v947 = vrot.slane %v939, 2
  %v948 = vsel %vm134, %v946, %v947
  %v949 = vrot.slane %v940, 2
  %v950 = vrot.slane %v941, 2
  %v951 = vsel %vm134, %v949, %v950
  %v954 = vadd.f32 %v888, %v948
  %v955 = vadd.f32 %v889, %v951
  %v956 = vlaneseq
  %v957 = vshrl.u32 %v956, 7
  %v958 = vsub.s32 1, %v957
  %v959 = vrot.slane %v21, %v958
  %v960 = vmul.f32 %v506, %v959
  %v961 = vmul.f32 %v507, %v959
  %v962 = vmul.f32 %v508, %v959
  %v963 = vmul.f32 %v509, %v959
  %v968 = vrot.slane %v960, 2
  %v969 = vrot.slane %v961, 2
  %v970 = vsel %vm134, %v968, %v969
  %v971 = vrot.slane %v962, 2
  %v972 = vrot.slane %v963, 2
  %v973 = vsel %vm134, %v971, %v972
  %v976 = vadd.f32 %v910, %v970
  %v977 = vadd.f32 %v911, %v973
  %s978 = scalar_lea.vmem %s0, 128
  %v979 = vld [vmem:[%s978] sm:$0xff]
  %v980 = vld [vmem:[%s978 + $0x8] sm:$0x3]
  %v981 = vld [vmem:[%s978 + $0x10] sm:$0xff]
  %v982 = vld [vmem:[%s978 + $0x18] sm:$0x3]
  %v983 = vld [vmem:[%s978 + $0x20] sm:$0xff]
  %v984 = vld [vmem:[%s978 + $0x28] sm:$0x3]
  %v985 = vld [vmem:[%s978 + $0x30] sm:$0xff]
  %v986 = vld [vmem:[%s978 + $0x38] sm:$0x3]
  %v987 = vlaneseq
  %v988 = vshrl.u32 %v987, 7
  %v989 = vsub.s32 2, %v988
  %v990 = vrot.slane %v13, %v989
  %v991 = vmul.f32 %v979, %v990
  %v992 = vmul.f32 %v981, %v990
  %v993 = vadd.f32 %v932, %v991
  %v994 = vadd.f32 %v933, %v992
  %v995 = vlaneseq
  %v996 = vshrl.u32 %v995, 7
  %v997 = vsub.s32 2, %v996
  %v998 = vrot.slane %v17, %v997
  %v999 = vmul.f32 %v979, %v998
  %v1000 = vmul.f32 %v981, %v998
  %v1001 = vadd.f32 %v954, %v999
  %v1002 = vadd.f32 %v955, %v1000
  %v1003 = vlaneseq
  %v1004 = vshrl.u32 %v1003, 7
  %v1005 = vsub.s32 2, %v1004
  %v1006 = vrot.slane %v21, %v1005
  %v1007 = vmul.f32 %v979, %v1006
  %v1008 = vmul.f32 %v981, %v1006
  %v1009 = vadd.f32 %v976, %v1007
  %v1010 = vadd.f32 %v977, %v1008
  %v1011 = vlaneseq
  %v1012 = vshrl.u32 %v1011, 7
  %v1013 = vsub.s32 3, %v1012
  %v1014 = vrot.slane %v13, %v1013
  %v1015 = vmul.f32 %v979, %v1014
  %v1016 = vmul.f32 %v980, %v1014
  %v1017 = vmul.f32 %v981, %v1014
  %v1018 = vmul.f32 %v982, %v1014
  %v1023 = vrot.slane %v1015, 1
  %v1024 = vrot.slane %v1016, 1
  %v1025 = vsel %vm67, %v1023, %v1024
  %v1026 = vrot.slane %v1017, 1
  %v1027 = vrot.slane %v1018, 1
  %v1028 = vsel %vm67, %v1026, %v1027
  %v1031 = vadd.f32 %v993, %v1025
  %v1032 = vadd.f32 %v994, %v1028
  %v1033 = vlaneseq
  %v1034 = vshrl.u32 %v1033, 7
  %v1035 = vsub.s32 3, %v1034
  %v1036 = vrot.slane %v17, %v1035
  %v1037 = vmul.f32 %v979, %v1036
  %v1038 = vmul.f32 %v980, %v1036
  %v1039 = vmul.f32 %v981, %v1036
  %v1040 = vmul.f32 %v982, %v1036
  %v1045 = vrot.slane %v1037, 1
  %v1046 = vrot.slane %v1038, 1
  %v1047 = vsel %vm67, %v1045, %v1046
  %v1048 = vrot.slane %v1039, 1
  %v1049 = vrot.slane %v1040, 1
  %v1050 = vsel %vm67, %v1048, %v1049
  %v1053 = vadd.f32 %v1001, %v1047
  %v1054 = vadd.f32 %v1002, %v1050
  %v1055 = vlaneseq
  %v1056 = vshrl.u32 %v1055, 7
  %v1057 = vsub.s32 3, %v1056
  %v1058 = vrot.slane %v21, %v1057
  %v1059 = vmul.f32 %v979, %v1058
  %v1060 = vmul.f32 %v980, %v1058
  %v1061 = vmul.f32 %v981, %v1058
  %v1062 = vmul.f32 %v982, %v1058
  %v1067 = vrot.slane %v1059, 1
  %v1068 = vrot.slane %v1060, 1
  %v1069 = vsel %vm67, %v1067, %v1068
  %v1070 = vrot.slane %v1061, 1
  %v1071 = vrot.slane %v1062, 1
  %v1072 = vsel %vm67, %v1070, %v1071
  %v1075 = vadd.f32 %v1009, %v1069
  %v1076 = vadd.f32 %v1010, %v1072
  %v1077 = vlaneseq
  %v1078 = vshrl.u32 %v1077, 7
  %v1079 = vsub.s32 4, %v1078
  %v1080 = vrot.slane %v13, %v1079
  %v1081 = vmul.f32 %v979, %v1080
  %v1082 = vmul.f32 %v980, %v1080
  %v1083 = vmul.f32 %v981, %v1080
  %v1084 = vmul.f32 %v982, %v1080
  %v1089 = vrot.slane %v1081, 2
  %v1090 = vrot.slane %v1082, 2
  %v1091 = vsel %vm134, %v1089, %v1090
  %v1092 = vrot.slane %v1083, 2
  %v1093 = vrot.slane %v1084, 2
  %v1094 = vsel %vm134, %v1092, %v1093
  %v1097 = vadd.f32 %v1031, %v1091
  %v1098 = vadd.f32 %v1032, %v1094
  %v1099 = vlaneseq
  %v1100 = vshrl.u32 %v1099, 7
  %v1101 = vsub.s32 4, %v1100
  %v1102 = vrot.slane %v17, %v1101
  %v1103 = vmul.f32 %v979, %v1102
  %v1104 = vmul.f32 %v980, %v1102
  %v1105 = vmul.f32 %v981, %v1102
  %v1106 = vmul.f32 %v982, %v1102
  %v1111 = vrot.slane %v1103, 2
  %v1112 = vrot.slane %v1104, 2
  %v1113 = vsel %vm134, %v1111, %v1112
  %v1114 = vrot.slane %v1105, 2
  %v1115 = vrot.slane %v1106, 2
  %v1116 = vsel %vm134, %v1114, %v1115
  %v1119 = vadd.f32 %v1053, %v1113
  %v1120 = vadd.f32 %v1054, %v1116
  %v1121 = vlaneseq
  %v1122 = vshrl.u32 %v1121, 7
  %v1123 = vsub.s32 4, %v1122
  %v1124 = vrot.slane %v21, %v1123
  %v1125 = vmul.f32 %v979, %v1124
  %v1126 = vmul.f32 %v980, %v1124
  %v1127 = vmul.f32 %v981, %v1124
  %v1128 = vmul.f32 %v982, %v1124
  %v1133 = vrot.slane %v1125, 2
  %v1134 = vrot.slane %v1126, 2
  %v1135 = vsel %vm134, %v1133, %v1134
  %v1136 = vrot.slane %v1127, 2
  %v1137 = vrot.slane %v1128, 2
  %v1138 = vsel %vm134, %v1136, %v1137
  %v1141 = vadd.f32 %v1075, %v1135
  %v1142 = vadd.f32 %v1076, %v1138
  %v1143 = vlaneseq
  %v1144 = vshrl.u32 %v1143, 7
  %v1145 = vsub.s32 5, %v1144
  %v1146 = vrot.slane %v13, %v1145
  %v1147 = vmul.f32 %v981, %v1146
  %v1148 = vmul.f32 %v983, %v1146
  %v1149 = vadd.f32 %v1097, %v1147
  %v1150 = vadd.f32 %v1098, %v1148
  %v1151 = vlaneseq
  %v1152 = vshrl.u32 %v1151, 7
  %v1153 = vsub.s32 5, %v1152
  %v1154 = vrot.slane %v17, %v1153
  %v1155 = vmul.f32 %v981, %v1154
  %v1156 = vmul.f32 %v983, %v1154
  %v1157 = vadd.f32 %v1119, %v1155
  %v1158 = vadd.f32 %v1120, %v1156
  %v1159 = vlaneseq
  %v1160 = vshrl.u32 %v1159, 7
  %v1161 = vsub.s32 5, %v1160
  %v1162 = vrot.slane %v21, %v1161
  %v1163 = vmul.f32 %v981, %v1162
  %v1164 = vmul.f32 %v983, %v1162
  %v1165 = vadd.f32 %v1141, %v1163
  %v1166 = vadd.f32 %v1142, %v1164
  %v1167 = vlaneseq
  %v1168 = vshrl.u32 %v1167, 7
  %v1169 = vsub.s32 6, %v1168
  %v1170 = vrot.slane %v13, %v1169
  %v1171 = vmul.f32 %v981, %v1170
  %v1172 = vmul.f32 %v982, %v1170
  %v1173 = vmul.f32 %v983, %v1170
  %v1174 = vmul.f32 %v984, %v1170
  %v1179 = vrot.slane %v1171, 1
  %v1180 = vrot.slane %v1172, 1
  %v1181 = vsel %vm67, %v1179, %v1180
  %v1182 = vrot.slane %v1173, 1
  %v1183 = vrot.slane %v1174, 1
  %v1184 = vsel %vm67, %v1182, %v1183
  %v1187 = vadd.f32 %v1149, %v1181
  %v1188 = vadd.f32 %v1150, %v1184
  %v1189 = vlaneseq
  %v1190 = vshrl.u32 %v1189, 7
  %v1191 = vsub.s32 6, %v1190
  %v1192 = vrot.slane %v17, %v1191
  %v1193 = vmul.f32 %v981, %v1192
  %v1194 = vmul.f32 %v982, %v1192
  %v1195 = vmul.f32 %v983, %v1192
  %v1196 = vmul.f32 %v984, %v1192
  %v1201 = vrot.slane %v1193, 1
  %v1202 = vrot.slane %v1194, 1
  %v1203 = vsel %vm67, %v1201, %v1202
  %v1204 = vrot.slane %v1195, 1
  %v1205 = vrot.slane %v1196, 1
  %v1206 = vsel %vm67, %v1204, %v1205
  %v1209 = vadd.f32 %v1157, %v1203
  %v1210 = vadd.f32 %v1158, %v1206
  %v1211 = vlaneseq
  %v1212 = vshrl.u32 %v1211, 7
  %v1213 = vsub.s32 6, %v1212
  %v1214 = vrot.slane %v21, %v1213
  %v1215 = vmul.f32 %v981, %v1214
  %v1216 = vmul.f32 %v982, %v1214
  %v1217 = vmul.f32 %v983, %v1214
  %v1218 = vmul.f32 %v984, %v1214
  %v1223 = vrot.slane %v1215, 1
  %v1224 = vrot.slane %v1216, 1
  %v1225 = vsel %vm67, %v1223, %v1224
  %v1226 = vrot.slane %v1217, 1
  %v1227 = vrot.slane %v1218, 1
  %v1228 = vsel %vm67, %v1226, %v1227
  %v1231 = vadd.f32 %v1165, %v1225
  %v1232 = vadd.f32 %v1166, %v1228
  %v1233 = vlaneseq
  %v1234 = vshrl.u32 %v1233, 7
  %v1235 = vsub.s32 7, %v1234
  %v1236 = vrot.slane %v13, %v1235
  %v1237 = vmul.f32 %v981, %v1236
  %v1238 = vmul.f32 %v982, %v1236
  %v1239 = vmul.f32 %v983, %v1236
  %v1240 = vmul.f32 %v984, %v1236
  %v1245 = vrot.slane %v1237, 2
  %v1246 = vrot.slane %v1238, 2
  %v1247 = vsel %vm134, %v1245, %v1246
  %v1248 = vrot.slane %v1239, 2
  %v1249 = vrot.slane %v1240, 2
  %v1250 = vsel %vm134, %v1248, %v1249
  %v1253 = vadd.f32 %v1187, %v1247
  %v1254 = vadd.f32 %v1188, %v1250
  %v1255 = vlaneseq
  %v1256 = vshrl.u32 %v1255, 7
  %v1257 = vsub.s32 7, %v1256
  %v1258 = vrot.slane %v17, %v1257
  %v1259 = vmul.f32 %v981, %v1258
  %v1260 = vmul.f32 %v982, %v1258
  %v1261 = vmul.f32 %v983, %v1258
  %v1262 = vmul.f32 %v984, %v1258
  %v1267 = vrot.slane %v1259, 2
  %v1268 = vrot.slane %v1260, 2
  %v1269 = vsel %vm134, %v1267, %v1268
  %v1270 = vrot.slane %v1261, 2
  %v1271 = vrot.slane %v1262, 2
  %v1272 = vsel %vm134, %v1270, %v1271
  %v1275 = vadd.f32 %v1209, %v1269
  %v1276 = vadd.f32 %v1210, %v1272
  %v1277 = vlaneseq
  %v1278 = vshrl.u32 %v1277, 7
  %v1279 = vsub.s32 7, %v1278
  %v1280 = vrot.slane %v21, %v1279
  %v1281 = vmul.f32 %v981, %v1280
  %v1282 = vmul.f32 %v982, %v1280
  %v1283 = vmul.f32 %v983, %v1280
  %v1284 = vmul.f32 %v984, %v1280
  %v1289 = vrot.slane %v1281, 2
  %v1290 = vrot.slane %v1282, 2
  %v1291 = vsel %vm134, %v1289, %v1290
  %v1292 = vrot.slane %v1283, 2
  %v1293 = vrot.slane %v1284, 2
  %v1294 = vsel %vm134, %v1292, %v1293
  %v1297 = vadd.f32 %v1231, %v1291
  %v1298 = vadd.f32 %v1232, %v1294
  %v1299 = vlaneseq
  %v1300 = vshrl.u32 %v1299, 7
  %v1301 = vsub.s32 0, %v1300
  %v1302 = vrot.slane %v14, %v1301
  %v1303 = vmul.f32 %v983, %v1302
  %v1304 = vmul.f32 %v985, %v1302
  %v1305 = vadd.f32 %v1253, %v1303
  %v1306 = vadd.f32 %v1254, %v1304
  %v1307 = vlaneseq
  %v1308 = vshrl.u32 %v1307, 7
  %v1309 = vsub.s32 0, %v1308
  %v1310 = vrot.slane %v18, %v1309
  %v1311 = vmul.f32 %v983, %v1310
  %v1312 = vmul.f32 %v985, %v1310
  %v1313 = vadd.f32 %v1275, %v1311
  %v1314 = vadd.f32 %v1276, %v1312
  %v1315 = vlaneseq
  %v1316 = vshrl.u32 %v1315, 7
  %v1317 = vsub.s32 0, %v1316
  %v1318 = vrot.slane %v22, %v1317
  %v1319 = vmul.f32 %v983, %v1318
  %v1320 = vmul.f32 %v985, %v1318
  %v1321 = vadd.f32 %v1297, %v1319
  %v1322 = vadd.f32 %v1298, %v1320
  %v1323 = vlaneseq
  %v1324 = vshrl.u32 %v1323, 7
  %v1325 = vsub.s32 1, %v1324
  %v1326 = vrot.slane %v14, %v1325
  %v1327 = vmul.f32 %v983, %v1326
  %v1328 = vmul.f32 %v984, %v1326
  %v1329 = vmul.f32 %v985, %v1326
  %v1330 = vmul.f32 %v986, %v1326
  %v1335 = vrot.slane %v1327, 1
  %v1336 = vrot.slane %v1328, 1
  %v1337 = vsel %vm67, %v1335, %v1336
  %v1338 = vrot.slane %v1329, 1
  %v1339 = vrot.slane %v1330, 1
  %v1340 = vsel %vm67, %v1338, %v1339
  %v1343 = vadd.f32 %v1305, %v1337
  %v1344 = vadd.f32 %v1306, %v1340
  %v1345 = vlaneseq
  %v1346 = vshrl.u32 %v1345, 7
  %v1347 = vsub.s32 1, %v1346
  %v1348 = vrot.slane %v18, %v1347
  %v1349 = vmul.f32 %v983, %v1348
  %v1350 = vmul.f32 %v984, %v1348
  %v1351 = vmul.f32 %v985, %v1348
  %v1352 = vmul.f32 %v986, %v1348
  %v1357 = vrot.slane %v1349, 1
  %v1358 = vrot.slane %v1350, 1
  %v1359 = vsel %vm67, %v1357, %v1358
  %v1360 = vrot.slane %v1351, 1
  %v1361 = vrot.slane %v1352, 1
  %v1362 = vsel %vm67, %v1360, %v1361
  %v1365 = vadd.f32 %v1313, %v1359
  %v1366 = vadd.f32 %v1314, %v1362
  %v1367 = vlaneseq
  %v1368 = vshrl.u32 %v1367, 7
  %v1369 = vsub.s32 1, %v1368
  %v1370 = vrot.slane %v22, %v1369
  %v1371 = vmul.f32 %v983, %v1370
  %v1372 = vmul.f32 %v984, %v1370
  %v1373 = vmul.f32 %v985, %v1370
  %v1374 = vmul.f32 %v986, %v1370
  %v1379 = vrot.slane %v1371, 1
  %v1380 = vrot.slane %v1372, 1
  %v1381 = vsel %vm67, %v1379, %v1380
  %v1382 = vrot.slane %v1373, 1
  %v1383 = vrot.slane %v1374, 1
  %v1384 = vsel %vm67, %v1382, %v1383
  %v1387 = vadd.f32 %v1321, %v1381
  %v1388 = vadd.f32 %v1322, %v1384
  %v1389 = vlaneseq
  %v1390 = vshrl.u32 %v1389, 7
  %v1391 = vsub.s32 2, %v1390
  %v1392 = vrot.slane %v14, %v1391
  %v1393 = vmul.f32 %v983, %v1392
  %v1394 = vmul.f32 %v984, %v1392
  %v1395 = vmul.f32 %v985, %v1392
  %v1396 = vmul.f32 %v986, %v1392
  %v1401 = vrot.slane %v1393, 2
  %v1402 = vrot.slane %v1394, 2
  %v1403 = vsel %vm134, %v1401, %v1402
  %v1404 = vrot.slane %v1395, 2
  %v1405 = vrot.slane %v1396, 2
  %v1406 = vsel %vm134, %v1404, %v1405
  %v1409 = vadd.f32 %v1343, %v1403
  %v1410 = vadd.f32 %v1344, %v1406
  %v1411 = vlaneseq
  %v1412 = vshrl.u32 %v1411, 7
  %v1413 = vsub.s32 2, %v1412
  %v1414 = vrot.slane %v18, %v1413
  %v1415 = vmul.f32 %v983, %v1414
  %v1416 = vmul.f32 %v984, %v1414
  %v1417 = vmul.f32 %v985, %v1414
  %v1418 = vmul.f32 %v986, %v1414
  %v1423 = vrot.slane %v1415, 2
  %v1424 = vrot.slane %v1416, 2
  %v1425 = vsel %vm134, %v1423, %v1424
  %v1426 = vrot.slane %v1417, 2
  %v1427 = vrot.slane %v1418, 2
  %v1428 = vsel %vm134, %v1426, %v1427
  %v1431 = vadd.f32 %v1365, %v1425
  %v1432 = vadd.f32 %v1366, %v1428
  %v1433 = vlaneseq
  %v1434 = vshrl.u32 %v1433, 7
  %v1435 = vsub.s32 2, %v1434
  %v1436 = vrot.slane %v22, %v1435
  %v1437 = vmul.f32 %v983, %v1436
  %v1438 = vmul.f32 %v984, %v1436
  %v1439 = vmul.f32 %v985, %v1436
  %v1440 = vmul.f32 %v986, %v1436
  %v1445 = vrot.slane %v1437, 2
  %v1446 = vrot.slane %v1438, 2
  %v1447 = vsel %vm134, %v1445, %v1446
  %v1448 = vrot.slane %v1439, 2
  %v1449 = vrot.slane %v1440, 2
  %v1450 = vsel %vm134, %v1448, %v1449
  %v1453 = vadd.f32 %v1387, %v1447
  %v1454 = vadd.f32 %v1388, %v1450
  %1455 = vst [vmem:[%s2] sm:$0xff] %v1409
  %1456 = vst [vmem:[%s2 + $0x8] sm:$0xff] %v1410
  %s1457 = scalar_lea.vmem %s2, 16
  %1458 = vst [vmem:[%s1457] sm:$0xff] %v1431
  %1459 = vst [vmem:[%s1457 + $0x8] sm:$0xff] %v1432
  %s1460 = scalar_lea.vmem %s2, 32
  %1461 = vst [vmem:[%s1460] sm:$0xff] %v1453
  %1462 = vst [vmem:[%s1460 + $0x8] sm:$0xff] %v1454
  // Predicated region
  $region10: #{voxel_perception_net.1} parent=0 // pred_check
    _
  $region11: #{voxel_perception_net.1} parent=0 // pred_check_branch
    %1464 = sbr.rel (0) target = $region13
  $region12: #{voxel_perception_net.1} parent=0 // pred_region
    _
  $region13: #{voxel_perception_net.1} parent=0 // pred_fallthru
    _
  // Predicated region
  $region14: #{voxel_perception_net.1} parent=0 // pred_check
    _
  $region15: #{voxel_perception_net.1} parent=0 // pred_check_branch
    %1466 = sbr.rel (0) target = $region17
  $region16: #{voxel_perception_net.1} parent=0 // pred_region
    _
  $region17: #{voxel_perception_net.1} parent=0 // pred_fallthru
    _

</llo_original>
